<compile_context>
chip_gen: v7x
topology: tpu7x:2x2x1
jax: 0.10.0
libtpu: 0.0.40
codegen_flags: <defaults>
</compile_context>

<pallas_src>
import jax
import jax.numpy as jnp
from jax import lax
from jax.experimental import pallas as pl
from jax.experimental.pallas import tpu as pltpu

INPUT_SIZE = 8            # input_size in MainModel.__init__
INTER_SIZE = 32           # intermediate_size
HIDDEN = INTER_SIZE // 2  # per-direction LSTM hidden size (bidirectional)


def _main_model_kernel(
    x_pair_ref,   # (T, B, 2D)  f32   [x_t | x_{T-1-t}] per step, time-major
    seqlen_ref,   # (B, 1)      i32   valid lengths
    golds_ref,    # (B, 1)      f32   regression targets
    wih_ref,      # (2D, 8H)    f32   block-diag fused input weights (gate-interleaved cols)
    whh_ref,      # (2H, 8H)    f32   block-diag fused hidden weights
    b_ref,        # (1, 8H)     f32   fused bias (b_ih + b_hh), both directions
    w1_ref,       # (2H, 32)    f32   predictor layer 1 weight
    b1_ref,       # (1, 32)     f32   predictor layer 1 bias
    w2_ref,       # (32, 1)     f32   predictor layer 2 weight
    b2_ref,       # (1, 1)      f32   predictor layer 2 bias
    loss_ref,     # (1, 1)      f32   output: MSE loss
    preds_ref,    # (B, 1)      f32   output: predictions
):
    T, B, _ = x_pair_ref.shape
    H = HIDDEN
    H2 = 2 * H                         # fused [fwd|bwd] state width = 32

    seq_len = seqlen_ref[...]          # (B, 1) int32
    wih = wih_ref[...]                 # (2D, 8H)
    whh = whh_ref[...]                 # (2H, 8H)
    bias = b_ref[...]                  # (1, 8H)

    # ---- hoisted (parallel) work: input projections + bias, valid-step masks ----
    # Each projection is (B, 2D) @ (2D, 8H) -> (B, 128); independent of the carry,
    # so the scheduler can pipeline them off the serial recurrence path.
    xp = [
        jnp.dot(x_pair_ref[t], wih, preferred_element_type=jnp.float32) + bias
        for t in range(T)
    ]

    # Column t-index differs between the fwd half (time t) and bwd half (time T-1-t).
    is_fwd_col = lax.broadcasted_iota(jnp.int32, (B, H2), 1) < H          # (B, 2H) bool
    masks = [jnp.where(is_fwd_col, t, T - 1 - t) < seq_len for t in range(T)]

    # ---- serial recurrence: one lane-dense (B,2H)@(2H,8H) matmul per step ----
    h = jnp.zeros((B, H2), jnp.float32)
    c = jnp.zeros((B, H2), jnp.float32)
    for t in range(T):                 # T is a small compile-time constant -> unrolled
        gates = xp[t] + jnp.dot(h, whh, preferred_element_type=jnp.float32)  # (B, 8H)
        i_g = jax.nn.sigmoid(gates[:, 0 * H2:1 * H2])
        f_g = jax.nn.sigmoid(gates[:, 1 * H2:2 * H2])
        g_g = jnp.tanh(gates[:, 2 * H2:3 * H2])
        o_g = jax.nn.sigmoid(gates[:, 3 * H2:4 * H2])
        c_new = f_g * c + i_g * g_g
        h_new = o_g * jnp.tanh(c_new)
        # pack_padded_sequence semantics: only update inside each half's valid range.
        h = jnp.where(masks[t], h_new, h)
        c = jnp.where(masks[t], c_new, c)

    # h == concat([h_fwd_final, h_bwd_final]) -> predictor: Linear -> ReLU -> Linear
    hidden = jnp.maximum(
        jnp.dot(h, w1_ref[...], preferred_element_type=jnp.float32) + b1_ref[...], 0.0)
    preds = jnp.dot(hidden, w2_ref[...], preferred_element_type=jnp.float32) + b2_ref[...]
    preds_ref[...] = preds                               # (B, 1)

    # MSE( squeeze(preds), golds )
    diff = preds - golds_ref[...]                        # (B, 1)
    loss_ref[...] = jnp.sum(diff * diff, axis=0, keepdims=True) * (1.0 / B)


def init_params(key):
    """Deterministic parameter init (PyTorch-style uniform(-1/sqrt(H), 1/sqrt(H)))."""
    D, H = INPUT_SIZE, HIDDEN
    bound_lstm = 1.0 / jnp.sqrt(jnp.float32(H))
    bound_lin = 1.0 / jnp.sqrt(jnp.float32(INTER_SIZE))
    keys = jax.random.split(key, 10)

    def u(k, shape, bound):
        return jax.random.uniform(k, shape, jnp.float32, -bound, bound)

    return dict(
        wih_f=u(keys[0], (4, D, H), bound_lstm),   # per-gate [i, f, g, o]
        whh_f=u(keys[1], (4, H, H), bound_lstm),
        b_f=u(keys[2], (4, 1, H), bound_lstm),
        wih_b=u(keys[3], (4, D, H), bound_lstm),
        whh_b=u(keys[4], (4, H, H), bound_lstm),
        b_b=u(keys[5], (4, 1, H), bound_lstm),
        w1=u(keys[6], (2 * H, INTER_SIZE), bound_lin),
        b1=u(keys[7], (1, INTER_SIZE), bound_lin),
        w2=u(keys[8], (INTER_SIZE, 1), bound_lin),
        b2=u(keys[9], (1, 1), bound_lin),
    )


def _pack_lstm_weights(params):
    """Fuse per-gate LSTM weights into block-diagonal, lane-dense layouts.

    Column layout of the fused (.., 8H) matrices (gate-major, direction-minor):
      [i_f | i_b | f_f | f_b | g_f | g_b | o_f | o_b], each block H wide,
    so gate slice [:, g*2H:(g+1)*2H] lines up with the (B, 2H) = [fwd|bwd] state.
    Block-diagonal rows keep the two directions independent inside one matmul.
    """
    D, H = INPUT_SIZE, HIDDEN
    G = 2 * H
    wih = jnp.zeros((2 * D, 8 * H), jnp.float32)
    whh = jnp.zeros((2 * H, 8 * H), jnp.float32)
    b = jnp.zeros((1, 8 * H), jnp.float32)
    for g in range(4):
        cf = slice(g * G, g * G + H)          # fwd columns of gate g
        cb = slice(g * G + H, (g + 1) * G)    # bwd columns of gate g
        wih = wih.at[0:D, cf].set(params["wih_f"][g])
        wih = wih.at[D:2 * D, cb].set(params["wih_b"][g])
        whh = whh.at[0:H, cf].set(params["whh_f"][g])
        whh = whh.at[H:2 * H, cb].set(params["whh_b"][g])
        b = b.at[:, cf].set(params["b_f"][g])
        b = b.at[:, cb].set(params["b_b"][g])
    return wih, whh, b


def main_model_forward(features, seq_num_list, golds, params):
    """features: (B, T, D_in) f32 ; seq_num_list: (B,) int32 ; golds: (B,) f32."""
    B, T, D = features.shape
    assert D == INPUT_SIZE
    H = HIDDEN

    # Time-major, with fwd/bwd inputs paired per step: x_pair[t] = [x_t | x_{T-1-t}].
    x_tm = jnp.transpose(features, (1, 0, 2)).astype(jnp.float32)   # (T, B, D)
    x_pair = jnp.concatenate([x_tm, x_tm[::-1]], axis=-1)           # (T, B, 2D)
    seqlen = seq_num_list.astype(jnp.int32).reshape(B, 1)
    golds2d = golds.astype(jnp.float32).reshape(B, 1)

    wih, whh, b = _pack_lstm_weights(params)

    vmem = pl.BlockSpec(memory_space=pltpu.MemorySpace.VMEM)
    n_inputs = 10

    # Advisory cost estimate so XLA doesn't serialize unrelated work behind this
    # microsecond-scale, latency-bound kernel.
    flops = (T * (2 * B * (2 * D) * (8 * H) + 2 * B * (2 * H) * (8 * H))
             + 2 * B * (2 * H) * INTER_SIZE + 2 * B * INTER_SIZE)
    transcendentals = T * B * 5 * (2 * H)
    bytes_accessed = 4 * (x_pair.size + wih.size + whh.size + b.size
                          + params["w1"].size + params["b1"].size
                          + params["w2"].size + params["b2"].size
                          + seqlen.size + golds2d.size + 1 + B)

    loss, preds = pl.pallas_call(
        _main_model_kernel,
        out_shape=(
            jax.ShapeDtypeStruct((1, 1), jnp.float32),
            jax.ShapeDtypeStruct((B, 1), jnp.float32),
        ),
        in_specs=[vmem] * n_inputs,
        out_specs=(vmem, vmem),
        cost_estimate=pl.CostEstimate(
            flops=int(flops),
            transcendentals=int(transcendentals),
            bytes_accessed=int(bytes_accessed),
        ),
    )(
        x_pair, seqlen, golds2d,
        wih, whh, b,
        params["w1"], params["b1"], params["w2"], params["b2"],
    )
    return loss[0, 0], preds


if __name__ == "__main__":
    key = jax.random.PRNGKey(0)
    k_feat, k_gold, k_param = jax.random.split(key, 3)

    B, T = 2, 8
    features = jax.random.normal(k_feat, (B, T, INPUT_SIZE), jnp.float32)
    seq_num_list = jnp.array([8, 5], dtype=jnp.int32)
    golds = jax.random.normal(k_gold, (B,), jnp.float32)

    params = init_params(k_param)

    loss, preds = jax.jit(main_model_forward)(features, seq_num_list, golds, params)
    jax.block_until_ready((loss, preds))
    print("KERNEL_OK")
</pallas_src>

<mosaic_0001>
module attributes {stable_mosaic.version = 11 : i64} {
  func.func @_main_model_kernel(%arg0: memref<8x2x16xf32, #tpu.memory_space<vmem>>, %arg1: memref<2x1xi32, #tpu.memory_space<vmem>>, %arg2: memref<2x1xf32, #tpu.memory_space<vmem>>, %arg3: memref<16x128xf32, #tpu.memory_space<vmem>>, %arg4: memref<32x128xf32, #tpu.memory_space<vmem>>, %arg5: memref<1x128xf32, #tpu.memory_space<vmem>>, %arg6: memref<32x32xf32, #tpu.memory_space<vmem>>, %arg7: memref<1x32xf32, #tpu.memory_space<vmem>>, %arg8: memref<32x1xf32, #tpu.memory_space<vmem>>, %arg9: memref<1x1xf32, #tpu.memory_space<vmem>>, %arg10: memref<1x1xf32, #tpu.memory_space<vmem>>, %arg11: memref<2x1xf32, #tpu.memory_space<vmem>>) attributes {dimension_semantics = [], scalar_prefetch = 0 : i64, scratch_operands = 0 : i64, tpu.core_type = #tpu.core_type<tc>} {
    %c0 = arith.constant 0 : index
    %c0_0 = arith.constant 0 : index
    %0 = vector.load %arg1[%c0, %c0_0] : memref<2x1xi32, #tpu.memory_space<vmem>>, vector<2x1xi32>
    %c0_1 = arith.constant 0 : index
    %c0_2 = arith.constant 0 : index
    %1 = vector.load %arg3[%c0_1, %c0_2] : memref<16x128xf32, #tpu.memory_space<vmem>>, vector<16x128xf32>
    %c0_3 = arith.constant 0 : index
    %c0_4 = arith.constant 0 : index
    %2 = vector.load %arg4[%c0_3, %c0_4] : memref<32x128xf32, #tpu.memory_space<vmem>>, vector<32x128xf32>
    %c0_5 = arith.constant 0 : index
    %c0_6 = arith.constant 0 : index
    %3 = vector.load %arg5[%c0_5, %c0_6] : memref<1x128xf32, #tpu.memory_space<vmem>>, vector<1x128xf32>
    %c0_7 = arith.constant 0 : index
    %c0_8 = arith.constant 0 : index
    %c0_9 = arith.constant 0 : index
    %4 = vector.load %arg0[%c0_7, %c0_8, %c0_9] : memref<8x2x16xf32, #tpu.memory_space<vmem>>, vector<1x2x16xf32>
    %5 = vector.shape_cast %4 : vector<1x2x16xf32> to vector<2x16xf32>
    %cst = arith.constant dense<0.000000e+00> : vector<2x128xf32>
    %6 = tpu.matmul %5, %1, %cst {dimension_numbers = #tpu.dot_dimension_numbers<[1], [0], [0], [1], [0, 0, 1, 1], [], []>} : vector<2x16xf32>, vector<16x128xf32>, vector<2x128xf32> -> vector<2x128xf32>
    %7 = vector.broadcast %3 : vector<1x128xf32> to vector<2x128xf32>
    %8 = arith.addf %6, %7 : vector<2x128xf32>
    %c1 = arith.constant 1 : index
    %c0_10 = arith.constant 0 : index
    %c0_11 = arith.constant 0 : index
    %9 = vector.load %arg0[%c1, %c0_10, %c0_11] : memref<8x2x16xf32, #tpu.memory_space<vmem>>, vector<1x2x16xf32>
    %10 = vector.shape_cast %9 : vector<1x2x16xf32> to vector<2x16xf32>
    %cst_12 = arith.constant dense<0.000000e+00> : vector<2x128xf32>
    %11 = tpu.matmul %10, %1, %cst_12 {dimension_numbers = #tpu.dot_dimension_numbers<[1], [0], [0], [1], [0, 0, 1, 1], [], []>} : vector<2x16xf32>, vector<16x128xf32>, vector<2x128xf32> -> vector<2x128xf32>
    %12 = vector.broadcast %3 : vector<1x128xf32> to vector<2x128xf32>
    %13 = arith.addf %11, %12 : vector<2x128xf32>
    %c2 = arith.constant 2 : index
    %c0_13 = arith.constant 0 : index
    %c0_14 = arith.constant 0 : index
    %14 = vector.load %arg0[%c2, %c0_13, %c0_14] : memref<8x2x16xf32, #tpu.memory_space<vmem>>, vector<1x2x16xf32>
    %15 = vector.shape_cast %14 : vector<1x2x16xf32> to vector<2x16xf32>
    %cst_15 = arith.constant dense<0.000000e+00> : vector<2x128xf32>
    %16 = tpu.matmul %15, %1, %cst_15 {dimension_numbers = #tpu.dot_dimension_numbers<[1], [0], [0], [1], [0, 0, 1, 1], [], []>} : vector<2x16xf32>, vector<16x128xf32>, vector<2x128xf32> -> vector<2x128xf32>
    %17 = vector.broadcast %3 : vector<1x128xf32> to vector<2x128xf32>
    %18 = arith.addf %16, %17 : vector<2x128xf32>
    %c3 = arith.constant 3 : index
    %c0_16 = arith.constant 0 : index
    %c0_17 = arith.constant 0 : index
    %19 = vector.load %arg0[%c3, %c0_16, %c0_17] : memref<8x2x16xf32, #tpu.memory_space<vmem>>, vector<1x2x16xf32>
    %20 = vector.shape_cast %19 : vector<1x2x16xf32> to vector<2x16xf32>
    %cst_18 = arith.constant dense<0.000000e+00> : vector<2x128xf32>
    %21 = tpu.matmul %20, %1, %cst_18 {dimension_numbers = #tpu.dot_dimension_numbers<[1], [0], [0], [1], [0, 0, 1, 1], [], []>} : vector<2x16xf32>, vector<16x128xf32>, vector<2x128xf32> -> vector<2x128xf32>
    %22 = vector.broadcast %3 : vector<1x128xf32> to vector<2x128xf32>
    %23 = arith.addf %21, %22 : vector<2x128xf32>
    %c4 = arith.constant 4 : index
    %c0_19 = arith.constant 0 : index
    %c0_20 = arith.constant 0 : index
    %24 = vector.load %arg0[%c4, %c0_19, %c0_20] : memref<8x2x16xf32, #tpu.memory_space<vmem>>, vector<1x2x16xf32>
    %25 = vector.shape_cast %24 : vector<1x2x16xf32> to vector<2x16xf32>
    %cst_21 = arith.constant dense<0.000000e+00> : vector<2x128xf32>
    %26 = tpu.matmul %25, %1, %cst_21 {dimension_numbers = #tpu.dot_dimension_numbers<[1], [0], [0], [1], [0, 0, 1, 1], [], []>} : vector<2x16xf32>, vector<16x128xf32>, vector<2x128xf32> -> vector<2x128xf32>
    %27 = vector.broadcast %3 : vector<1x128xf32> to vector<2x128xf32>
    %28 = arith.addf %26, %27 : vector<2x128xf32>
    %c5 = arith.constant 5 : index
    %c0_22 = arith.constant 0 : index
    %c0_23 = arith.constant 0 : index
    %29 = vector.load %arg0[%c5, %c0_22, %c0_23] : memref<8x2x16xf32, #tpu.memory_space<vmem>>, vector<1x2x16xf32>
    %30 = vector.shape_cast %29 : vector<1x2x16xf32> to vector<2x16xf32>
    %cst_24 = arith.constant dense<0.000000e+00> : vector<2x128xf32>
    %31 = tpu.matmul %30, %1, %cst_24 {dimension_numbers = #tpu.dot_dimension_numbers<[1], [0], [0], [1], [0, 0, 1, 1], [], []>} : vector<2x16xf32>, vector<16x128xf32>, vector<2x128xf32> -> vector<2x128xf32>
    %32 = vector.broadcast %3 : vector<1x128xf32> to vector<2x128xf32>
    %33 = arith.addf %31, %32 : vector<2x128xf32>
    %c6 = arith.constant 6 : index
    %c0_25 = arith.constant 0 : index
    %c0_26 = arith.constant 0 : index
    %34 = vector.load %arg0[%c6, %c0_25, %c0_26] : memref<8x2x16xf32, #tpu.memory_space<vmem>>, vector<1x2x16xf32>
    %35 = vector.shape_cast %34 : vector<1x2x16xf32> to vector<2x16xf32>
    %cst_27 = arith.constant dense<0.000000e+00> : vector<2x128xf32>
    %36 = tpu.matmul %35, %1, %cst_27 {dimension_numbers = #tpu.dot_dimension_numbers<[1], [0], [0], [1], [0, 0, 1, 1], [], []>} : vector<2x16xf32>, vector<16x128xf32>, vector<2x128xf32> -> vector<2x128xf32>
    %37 = vector.broadcast %3 : vector<1x128xf32> to vector<2x128xf32>
    %38 = arith.addf %36, %37 : vector<2x128xf32>
    %c7 = arith.constant 7 : index
    %c0_28 = arith.constant 0 : index
    %c0_29 = arith.constant 0 : index
    %39 = vector.load %arg0[%c7, %c0_28, %c0_29] : memref<8x2x16xf32, #tpu.memory_space<vmem>>, vector<1x2x16xf32>
    %40 = vector.shape_cast %39 : vector<1x2x16xf32> to vector<2x16xf32>
    %cst_30 = arith.constant dense<0.000000e+00> : vector<2x128xf32>
    %41 = tpu.matmul %40, %1, %cst_30 {dimension_numbers = #tpu.dot_dimension_numbers<[1], [0], [0], [1], [0, 0, 1, 1], [], []>} : vector<2x16xf32>, vector<16x128xf32>, vector<2x128xf32> -> vector<2x128xf32>
    %42 = vector.broadcast %3 : vector<1x128xf32> to vector<2x128xf32>
    %43 = arith.addf %41, %42 : vector<2x128xf32>
    %44 = tpu.iota {dimensions = array<i32: 1>} : vector<2x32xi32>
    %c16_i32 = arith.constant 16 : i32
    %45 = vector.broadcast %c16_i32 : i32 to vector<2x32xi32>
    %46 = arith.cmpi slt, %44, %45 : vector<2x32xi32>
    %c0_i32 = arith.constant 0 : i32
    %c7_i32 = arith.constant 7 : i32
    %47 = vector.broadcast %c0_i32 : i32 to vector<2x32xi32>
    %48 = vector.broadcast %c7_i32 : i32 to vector<2x32xi32>
    %49 = arith.select %46, %47, %48 : vector<2x32xi1>, vector<2x32xi32>
    %50 = vector.broadcast %0 : vector<2x1xi32> to vector<2x32xi32>
    %51 = arith.cmpi slt, %49, %50 : vector<2x32xi32>
    %c1_i32 = arith.constant 1 : i32
    %c6_i32 = arith.constant 6 : i32
    %52 = vector.broadcast %c1_i32 : i32 to vector<2x32xi32>
    %53 = vector.broadcast %c6_i32 : i32 to vector<2x32xi32>
    %54 = arith.select %46, %52, %53 : vector<2x32xi1>, vector<2x32xi32>
    %55 = vector.broadcast %0 : vector<2x1xi32> to vector<2x32xi32>
    %56 = arith.cmpi slt, %54, %55 : vector<2x32xi32>
    %c2_i32 = arith.constant 2 : i32
    %c5_i32 = arith.constant 5 : i32
    %57 = vector.broadcast %c2_i32 : i32 to vector<2x32xi32>
    %58 = vector.broadcast %c5_i32 : i32 to vector<2x32xi32>
    %59 = arith.select %46, %57, %58 : vector<2x32xi1>, vector<2x32xi32>
    %60 = vector.broadcast %0 : vector<2x1xi32> to vector<2x32xi32>
    %61 = arith.cmpi slt, %59, %60 : vector<2x32xi32>
    %c3_i32 = arith.constant 3 : i32
    %c4_i32 = arith.constant 4 : i32
    %62 = vector.broadcast %c3_i32 : i32 to vector<2x32xi32>
    %63 = vector.broadcast %c4_i32 : i32 to vector<2x32xi32>
    %64 = arith.select %46, %62, %63 : vector<2x32xi1>, vector<2x32xi32>
    %65 = vector.broadcast %0 : vector<2x1xi32> to vector<2x32xi32>
    %66 = arith.cmpi slt, %64, %65 : vector<2x32xi32>
    %c4_i32_31 = arith.constant 4 : i32
    %c3_i32_32 = arith.constant 3 : i32
    %67 = vector.broadcast %c4_i32_31 : i32 to vector<2x32xi32>
    %68 = vector.broadcast %c3_i32_32 : i32 to vector<2x32xi32>
    %69 = arith.select %46, %67, %68 : vector<2x32xi1>, vector<2x32xi32>
    %70 = vector.broadcast %0 : vector<2x1xi32> to vector<2x32xi32>
    %71 = arith.cmpi slt, %69, %70 : vector<2x32xi32>
    %c5_i32_33 = arith.constant 5 : i32
    %c2_i32_34 = arith.constant 2 : i32
    %72 = vector.broadcast %c5_i32_33 : i32 to vector<2x32xi32>
    %73 = vector.broadcast %c2_i32_34 : i32 to vector<2x32xi32>
    %74 = arith.select %46, %72, %73 : vector<2x32xi1>, vector<2x32xi32>
    %75 = vector.broadcast %0 : vector<2x1xi32> to vector<2x32xi32>
    %76 = arith.cmpi slt, %74, %75 : vector<2x32xi32>
    %c6_i32_35 = arith.constant 6 : i32
    %c1_i32_36 = arith.constant 1 : i32
    %77 = vector.broadcast %c6_i32_35 : i32 to vector<2x32xi32>
    %78 = vector.broadcast %c1_i32_36 : i32 to vector<2x32xi32>
    %79 = arith.select %46, %77, %78 : vector<2x32xi1>, vector<2x32xi32>
    %80 = vector.broadcast %0 : vector<2x1xi32> to vector<2x32xi32>
    %81 = arith.cmpi slt, %79, %80 : vector<2x32xi32>
    %c7_i32_37 = arith.constant 7 : i32
    %c0_i32_38 = arith.constant 0 : i32
    %82 = vector.broadcast %c7_i32_37 : i32 to vector<2x32xi32>
    %83 = vector.broadcast %c0_i32_38 : i32 to vector<2x32xi32>
    %84 = arith.select %46, %82, %83 : vector<2x32xi1>, vector<2x32xi32>
    %85 = vector.broadcast %0 : vector<2x1xi32> to vector<2x32xi32>
    %86 = arith.cmpi slt, %84, %85 : vector<2x32xi32>
    %cst_39 = arith.constant 0.000000e+00 : f32
    %87 = vector.broadcast %cst_39 : f32 to vector<2x32xf32>
    %cst_40 = arith.constant 0.000000e+00 : f32
    %88 = vector.broadcast %cst_40 : f32 to vector<2x32xf32>
    %cst_41 = arith.constant dense<0.000000e+00> : vector<2x128xf32>
    %89 = tpu.matmul %87, %2, %cst_41 {dimension_numbers = #tpu.dot_dimension_numbers<[1], [0], [0], [1], [0, 0, 1, 1], [], []>} : vector<2x32xf32>, vector<32x128xf32>, vector<2x128xf32> -> vector<2x128xf32>
    %90 = arith.addf %8, %89 : vector<2x128xf32>
    %91 = vector.extract_strided_slice %90 {offsets = [0, 0], sizes = [2, 32], strides = [1, 1]} : vector<2x128xf32> to vector<2x32xf32>
    %92 = arith.negf %91 : vector<2x32xf32>
    %93 = math.exp %92 : vector<2x32xf32>
    %cst_42 = arith.constant 1.000000e+00 : f32
    %94 = vector.broadcast %cst_42 : f32 to vector<2x32xf32>
    %95 = arith.addf %94, %93 : vector<2x32xf32>
    %96 = arith.divf %94, %95 : vector<2x32xf32>
    %97 = vector.extract_strided_slice %90 {offsets = [0, 32], sizes = [2, 32], strides = [1, 1]} : vector<2x128xf32> to vector<2x32xf32>
    %98 = arith.negf %97 : vector<2x32xf32>
    %99 = math.exp %98 : vector<2x32xf32>
    %cst_43 = arith.constant 1.000000e+00 : f32
    %100 = vector.broadcast %cst_43 : f32 to vector<2x32xf32>
    %101 = arith.addf %100, %99 : vector<2x32xf32>
    %102 = arith.divf %100, %101 : vector<2x32xf32>
    %103 = vector.extract_strided_slice %90 {offsets = [0, 64], sizes = [2, 32], strides = [1, 1]} : vector<2x128xf32> to vector<2x32xf32>
    %104 = math.tanh %103 : vector<2x32xf32>
    %105 = vector.extract_strided_slice %90 {offsets = [0, 96], sizes = [2, 32], strides = [1, 1]} : vector<2x128xf32> to vector<2x32xf32>
    %106 = arith.negf %105 : vector<2x32xf32>
    %107 = math.exp %106 : vector<2x32xf32>
    %cst_44 = arith.constant 1.000000e+00 : f32
    %108 = vector.broadcast %cst_44 : f32 to vector<2x32xf32>
    %109 = arith.addf %108, %107 : vector<2x32xf32>
    %110 = arith.divf %108, %109 : vector<2x32xf32>
    %111 = arith.mulf %102, %88 : vector<2x32xf32>
    %112 = arith.mulf %96, %104 : vector<2x32xf32>
    %113 = arith.addf %111, %112 : vector<2x32xf32>
    %114 = math.tanh %113 : vector<2x32xf32>
    %115 = arith.mulf %110, %114 : vector<2x32xf32>
    %116 = arith.select %51, %115, %87 : vector<2x32xi1>, vector<2x32xf32>
    %117 = arith.select %51, %113, %88 : vector<2x32xi1>, vector<2x32xf32>
    %cst_45 = arith.constant dense<0.000000e+00> : vector<2x128xf32>
    %118 = tpu.matmul %116, %2, %cst_45 {dimension_numbers = #tpu.dot_dimension_numbers<[1], [0], [0], [1], [0, 0, 1, 1], [], []>} : vector<2x32xf32>, vector<32x128xf32>, vector<2x128xf32> -> vector<2x128xf32>
    %119 = arith.addf %13, %118 : vector<2x128xf32>
    %120 = vector.extract_strided_slice %119 {offsets = [0, 0], sizes = [2, 32], strides = [1, 1]} : vector<2x128xf32> to vector<2x32xf32>
    %121 = arith.negf %120 : vector<2x32xf32>
    %122 = math.exp %121 : vector<2x32xf32>
    %cst_46 = arith.constant 1.000000e+00 : f32
    %123 = vector.broadcast %cst_46 : f32 to vector<2x32xf32>
    %124 = arith.addf %123, %122 : vector<2x32xf32>
    %125 = arith.divf %123, %124 : vector<2x32xf32>
    %126 = vector.extract_strided_slice %119 {offsets = [0, 32], sizes = [2, 32], strides = [1, 1]} : vector<2x128xf32> to vector<2x32xf32>
    %127 = arith.negf %126 : vector<2x32xf32>
    %128 = math.exp %127 : vector<2x32xf32>
    %cst_47 = arith.constant 1.000000e+00 : f32
    %129 = vector.broadcast %cst_47 : f32 to vector<2x32xf32>
    %130 = arith.addf %129, %128 : vector<2x32xf32>
    %131 = arith.divf %129, %130 : vector<2x32xf32>
    %132 = vector.extract_strided_slice %119 {offsets = [0, 64], sizes = [2, 32], strides = [1, 1]} : vector<2x128xf32> to vector<2x32xf32>
    %133 = math.tanh %132 : vector<2x32xf32>
    %134 = vector.extract_strided_slice %119 {offsets = [0, 96], sizes = [2, 32], strides = [1, 1]} : vector<2x128xf32> to vector<2x32xf32>
    %135 = arith.negf %134 : vector<2x32xf32>
    %136 = math.exp %135 : vector<2x32xf32>
    %cst_48 = arith.constant 1.000000e+00 : f32
    %137 = vector.broadcast %cst_48 : f32 to vector<2x32xf32>
    %138 = arith.addf %137, %136 : vector<2x32xf32>
    %139 = arith.divf %137, %138 : vector<2x32xf32>
    %140 = arith.mulf %131, %117 : vector<2x32xf32>
    %141 = arith.mulf %125, %133 : vector<2x32xf32>
    %142 = arith.addf %140, %141 : vector<2x32xf32>
    %143 = math.tanh %142 : vector<2x32xf32>
    %144 = arith.mulf %139, %143 : vector<2x32xf32>
    %145 = arith.select %56, %144, %116 : vector<2x32xi1>, vector<2x32xf32>
    %146 = arith.select %56, %142, %117 : vector<2x32xi1>, vector<2x32xf32>
    %cst_49 = arith.constant dense<0.000000e+00> : vector<2x128xf32>
    %147 = tpu.matmul %145, %2, %cst_49 {dimension_numbers = #tpu.dot_dimension_numbers<[1], [0], [0], [1], [0, 0, 1, 1], [], []>} : vector<2x32xf32>, vector<32x128xf32>, vector<2x128xf32> -> vector<2x128xf32>
    %148 = arith.addf %18, %147 : vector<2x128xf32>
    %149 = vector.extract_strided_slice %148 {offsets = [0, 0], sizes = [2, 32], strides = [1, 1]} : vector<2x128xf32> to vector<2x32xf32>
    %150 = arith.negf %149 : vector<2x32xf32>
    %151 = math.exp %150 : vector<2x32xf32>
    %cst_50 = arith.constant 1.000000e+00 : f32
    %152 = vector.broadcast %cst_50 : f32 to vector<2x32xf32>
    %153 = arith.addf %152, %151 : vector<2x32xf32>
    %154 = arith.divf %152, %153 : vector<2x32xf32>
    %155 = vector.extract_strided_slice %148 {offsets = [0, 32], sizes = [2, 32], strides = [1, 1]} : vector<2x128xf32> to vector<2x32xf32>
    %156 = arith.negf %155 : vector<2x32xf32>
    %157 = math.exp %156 : vector<2x32xf32>
    %cst_51 = arith.constant 1.000000e+00 : f32
    %158 = vector.broadcast %cst_51 : f32 to vector<2x32xf32>
    %159 = arith.addf %158, %157 : vector<2x32xf32>
    %160 = arith.divf %158, %159 : vector<2x32xf32>
    %161 = vector.extract_strided_slice %148 {offsets = [0, 64], sizes = [2, 32], strides = [1, 1]} : vector<2x128xf32> to vector<2x32xf32>
    %162 = math.tanh %161 : vector<2x32xf32>
    %163 = vector.extract_strided_slice %148 {offsets = [0, 96], sizes = [2, 32], strides = [1, 1]} : vector<2x128xf32> to vector<2x32xf32>
    %164 = arith.negf %163 : vector<2x32xf32>
    %165 = math.exp %164 : vector<2x32xf32>
    %cst_52 = arith.constant 1.000000e+00 : f32
    %166 = vector.broadcast %cst_52 : f32 to vector<2x32xf32>
    %167 = arith.addf %166, %165 : vector<2x32xf32>
    %168 = arith.divf %166, %167 : vector<2x32xf32>
    %169 = arith.mulf %160, %146 : vector<2x32xf32>
    %170 = arith.mulf %154, %162 : vector<2x32xf32>
    %171 = arith.addf %169, %170 : vector<2x32xf32>
    %172 = math.tanh %171 : vector<2x32xf32>
    %173 = arith.mulf %168, %172 : vector<2x32xf32>
    %174 = arith.select %61, %173, %145 : vector<2x32xi1>, vector<2x32xf32>
    %175 = arith.select %61, %171, %146 : vector<2x32xi1>, vector<2x32xf32>
    %cst_53 = arith.constant dense<0.000000e+00> : vector<2x128xf32>
    %176 = tpu.matmul %174, %2, %cst_53 {dimension_numbers = #tpu.dot_dimension_numbers<[1], [0], [0], [1], [0, 0, 1, 1], [], []>} : vector<2x32xf32>, vector<32x128xf32>, vector<2x128xf32> -> vector<2x128xf32>
    %177 = arith.addf %23, %176 : vector<2x128xf32>
    %178 = vector.extract_strided_slice %177 {offsets = [0, 0], sizes = [2, 32], strides = [1, 1]} : vector<2x128xf32> to vector<2x32xf32>
    %179 = arith.negf %178 : vector<2x32xf32>
    %180 = math.exp %179 : vector<2x32xf32>
    %cst_54 = arith.constant 1.000000e+00 : f32
    %181 = vector.broadcast %cst_54 : f32 to vector<2x32xf32>
    %182 = arith.addf %181, %180 : vector<2x32xf32>
    %183 = arith.divf %181, %182 : vector<2x32xf32>
    %184 = vector.extract_strided_slice %177 {offsets = [0, 32], sizes = [2, 32], strides = [1, 1]} : vector<2x128xf32> to vector<2x32xf32>
    %185 = arith.negf %184 : vector<2x32xf32>
    %186 = math.exp %185 : vector<2x32xf32>
    %cst_55 = arith.constant 1.000000e+00 : f32
    %187 = vector.broadcast %cst_55 : f32 to vector<2x32xf32>
    %188 = arith.addf %187, %186 : vector<2x32xf32>
    %189 = arith.divf %187, %188 : vector<2x32xf32>
    %190 = vector.extract_strided_slice %177 {offsets = [0, 64], sizes = [2, 32], strides = [1, 1]} : vector<2x128xf32> to vector<2x32xf32>
    %191 = math.tanh %190 : vector<2x32xf32>
    %192 = vector.extract_strided_slice %177 {offsets = [0, 96], sizes = [2, 32], strides = [1, 1]} : vector<2x128xf32> to vector<2x32xf32>
    %193 = arith.negf %192 : vector<2x32xf32>
    %194 = math.exp %193 : vector<2x32xf32>
    %cst_56 = arith.constant 1.000000e+00 : f32
    %195 = vector.broadcast %cst_56 : f32 to vector<2x32xf32>
    %196 = arith.addf %195, %194 : vector<2x32xf32>
    %197 = arith.divf %195, %196 : vector<2x32xf32>
    %198 = arith.mulf %189, %175 : vector<2x32xf32>
    %199 = arith.mulf %183, %191 : vector<2x32xf32>
    %200 = arith.addf %198, %199 : vector<2x32xf32>
    %201 = math.tanh %200 : vector<2x32xf32>
    %202 = arith.mulf %197, %201 : vector<2x32xf32>
    %203 = arith.select %66, %202, %174 : vector<2x32xi1>, vector<2x32xf32>
    %204 = arith.select %66, %200, %175 : vector<2x32xi1>, vector<2x32xf32>
    %cst_57 = arith.constant dense<0.000000e+00> : vector<2x128xf32>
    %205 = tpu.matmul %203, %2, %cst_57 {dimension_numbers = #tpu.dot_dimension_numbers<[1], [0], [0], [1], [0, 0, 1, 1], [], []>} : vector<2x32xf32>, vector<32x128xf32>, vector<2x128xf32> -> vector<2x128xf32>
    %206 = arith.addf %28, %205 : vector<2x128xf32>
    %207 = vector.extract_strided_slice %206 {offsets = [0, 0], sizes = [2, 32], strides = [1, 1]} : vector<2x128xf32> to vector<2x32xf32>
    %208 = arith.negf %207 : vector<2x32xf32>
    %209 = math.exp %208 : vector<2x32xf32>
    %cst_58 = arith.constant 1.000000e+00 : f32
    %210 = vector.broadcast %cst_58 : f32 to vector<2x32xf32>
    %211 = arith.addf %210, %209 : vector<2x32xf32>
    %212 = arith.divf %210, %211 : vector<2x32xf32>
    %213 = vector.extract_strided_slice %206 {offsets = [0, 32], sizes = [2, 32], strides = [1, 1]} : vector<2x128xf32> to vector<2x32xf32>
    %214 = arith.negf %213 : vector<2x32xf32>
    %215 = math.exp %214 : vector<2x32xf32>
    %cst_59 = arith.constant 1.000000e+00 : f32
    %216 = vector.broadcast %cst_59 : f32 to vector<2x32xf32>
    %217 = arith.addf %216, %215 : vector<2x32xf32>
    %218 = arith.divf %216, %217 : vector<2x32xf32>
    %219 = vector.extract_strided_slice %206 {offsets = [0, 64], sizes = [2, 32], strides = [1, 1]} : vector<2x128xf32> to vector<2x32xf32>
    %220 = math.tanh %219 : vector<2x32xf32>
    %221 = vector.extract_strided_slice %206 {offsets = [0, 96], sizes = [2, 32], strides = [1, 1]} : vector<2x128xf32> to vector<2x32xf32>
    %222 = arith.negf %221 : vector<2x32xf32>
    %223 = math.exp %222 : vector<2x32xf32>
    %cst_60 = arith.constant 1.000000e+00 : f32
    %224 = vector.broadcast %cst_60 : f32 to vector<2x32xf32>
    %225 = arith.addf %224, %223 : vector<2x32xf32>
    %226 = arith.divf %224, %225 : vector<2x32xf32>
    %227 = arith.mulf %218, %204 : vector<2x32xf32>
    %228 = arith.mulf %212, %220 : vector<2x32xf32>
    %229 = arith.addf %227, %228 : vector<2x32xf32>
    %230 = math.tanh %229 : vector<2x32xf32>
    %231 = arith.mulf %226, %230 : vector<2x32xf32>
    %232 = arith.select %71, %231, %203 : vector<2x32xi1>, vector<2x32xf32>
    %233 = arith.select %71, %229, %204 : vector<2x32xi1>, vector<2x32xf32>
    %cst_61 = arith.constant dense<0.000000e+00> : vector<2x128xf32>
    %234 = tpu.matmul %232, %2, %cst_61 {dimension_numbers = #tpu.dot_dimension_numbers<[1], [0], [0], [1], [0, 0, 1, 1], [], []>} : vector<2x32xf32>, vector<32x128xf32>, vector<2x128xf32> -> vector<2x128xf32>
    %235 = arith.addf %33, %234 : vector<2x128xf32>
    %236 = vector.extract_strided_slice %235 {offsets = [0, 0], sizes = [2, 32], strides = [1, 1]} : vector<2x128xf32> to vector<2x32xf32>
    %237 = arith.negf %236 : vector<2x32xf32>
    %238 = math.exp %237 : vector<2x32xf32>
    %cst_62 = arith.constant 1.000000e+00 : f32
    %239 = vector.broadcast %cst_62 : f32 to vector<2x32xf32>
    %240 = arith.addf %239, %238 : vector<2x32xf32>
    %241 = arith.divf %239, %240 : vector<2x32xf32>
    %242 = vector.extract_strided_slice %235 {offsets = [0, 32], sizes = [2, 32], strides = [1, 1]} : vector<2x128xf32> to vector<2x32xf32>
    %243 = arith.negf %242 : vector<2x32xf32>
    %244 = math.exp %243 : vector<2x32xf32>
    %cst_63 = arith.constant 1.000000e+00 : f32
    %245 = vector.broadcast %cst_63 : f32 to vector<2x32xf32>
    %246 = arith.addf %245, %244 : vector<2x32xf32>
    %247 = arith.divf %245, %246 : vector<2x32xf32>
    %248 = vector.extract_strided_slice %235 {offsets = [0, 64], sizes = [2, 32], strides = [1, 1]} : vector<2x128xf32> to vector<2x32xf32>
    %249 = math.tanh %248 : vector<2x32xf32>
    %250 = vector.extract_strided_slice %235 {offsets = [0, 96], sizes = [2, 32], strides = [1, 1]} : vector<2x128xf32> to vector<2x32xf32>
    %251 = arith.negf %250 : vector<2x32xf32>
    %252 = math.exp %251 : vector<2x32xf32>
    %cst_64 = arith.constant 1.000000e+00 : f32
    %253 = vector.broadcast %cst_64 : f32 to vector<2x32xf32>
    %254 = arith.addf %253, %252 : vector<2x32xf32>
    %255 = arith.divf %253, %254 : vector<2x32xf32>
    %256 = arith.mulf %247, %233 : vector<2x32xf32>
    %257 = arith.mulf %241, %249 : vector<2x32xf32>
    %258 = arith.addf %256, %257 : vector<2x32xf32>
    %259 = math.tanh %258 : vector<2x32xf32>
    %260 = arith.mulf %255, %259 : vector<2x32xf32>
    %261 = arith.select %76, %260, %232 : vector<2x32xi1>, vector<2x32xf32>
    %262 = arith.select %76, %258, %233 : vector<2x32xi1>, vector<2x32xf32>
    %cst_65 = arith.constant dense<0.000000e+00> : vector<2x128xf32>
    %263 = tpu.matmul %261, %2, %cst_65 {dimension_numbers = #tpu.dot_dimension_numbers<[1], [0], [0], [1], [0, 0, 1, 1], [], []>} : vector<2x32xf32>, vector<32x128xf32>, vector<2x128xf32> -> vector<2x128xf32>
    %264 = arith.addf %38, %263 : vector<2x128xf32>
    %265 = vector.extract_strided_slice %264 {offsets = [0, 0], sizes = [2, 32], strides = [1, 1]} : vector<2x128xf32> to vector<2x32xf32>
    %266 = arith.negf %265 : vector<2x32xf32>
    %267 = math.exp %266 : vector<2x32xf32>
    %cst_66 = arith.constant 1.000000e+00 : f32
    %268 = vector.broadcast %cst_66 : f32 to vector<2x32xf32>
    %269 = arith.addf %268, %267 : vector<2x32xf32>
    %270 = arith.divf %268, %269 : vector<2x32xf32>
    %271 = vector.extract_strided_slice %264 {offsets = [0, 32], sizes = [2, 32], strides = [1, 1]} : vector<2x128xf32> to vector<2x32xf32>
    %272 = arith.negf %271 : vector<2x32xf32>
    %273 = math.exp %272 : vector<2x32xf32>
    %cst_67 = arith.constant 1.000000e+00 : f32
    %274 = vector.broadcast %cst_67 : f32 to vector<2x32xf32>
    %275 = arith.addf %274, %273 : vector<2x32xf32>
    %276 = arith.divf %274, %275 : vector<2x32xf32>
    %277 = vector.extract_strided_slice %264 {offsets = [0, 64], sizes = [2, 32], strides = [1, 1]} : vector<2x128xf32> to vector<2x32xf32>
    %278 = math.tanh %277 : vector<2x32xf32>
    %279 = vector.extract_strided_slice %264 {offsets = [0, 96], sizes = [2, 32], strides = [1, 1]} : vector<2x128xf32> to vector<2x32xf32>
    %280 = arith.negf %279 : vector<2x32xf32>
    %281 = math.exp %280 : vector<2x32xf32>
    %cst_68 = arith.constant 1.000000e+00 : f32
    %282 = vector.broadcast %cst_68 : f32 to vector<2x32xf32>
    %283 = arith.addf %282, %281 : vector<2x32xf32>
    %284 = arith.divf %282, %283 : vector<2x32xf32>
    %285 = arith.mulf %276, %262 : vector<2x32xf32>
    %286 = arith.mulf %270, %278 : vector<2x32xf32>
    %287 = arith.addf %285, %286 : vector<2x32xf32>
    %288 = math.tanh %287 : vector<2x32xf32>
    %289 = arith.mulf %284, %288 : vector<2x32xf32>
    %290 = arith.select %81, %289, %261 : vector<2x32xi1>, vector<2x32xf32>
    %291 = arith.select %81, %287, %262 : vector<2x32xi1>, vector<2x32xf32>
    %cst_69 = arith.constant dense<0.000000e+00> : vector<2x128xf32>
    %292 = tpu.matmul %290, %2, %cst_69 {dimension_numbers = #tpu.dot_dimension_numbers<[1], [0], [0], [1], [0, 0, 1, 1], [], []>} : vector<2x32xf32>, vector<32x128xf32>, vector<2x128xf32> -> vector<2x128xf32>
    %293 = arith.addf %43, %292 : vector<2x128xf32>
    %294 = vector.extract_strided_slice %293 {offsets = [0, 0], sizes = [2, 32], strides = [1, 1]} : vector<2x128xf32> to vector<2x32xf32>
    %295 = arith.negf %294 : vector<2x32xf32>
    %296 = math.exp %295 : vector<2x32xf32>
    %cst_70 = arith.constant 1.000000e+00 : f32
    %297 = vector.broadcast %cst_70 : f32 to vector<2x32xf32>
    %298 = arith.addf %297, %296 : vector<2x32xf32>
    %299 = arith.divf %297, %298 : vector<2x32xf32>
    %300 = vector.extract_strided_slice %293 {offsets = [0, 32], sizes = [2, 32], strides = [1, 1]} : vector<2x128xf32> to vector<2x32xf32>
    %301 = arith.negf %300 : vector<2x32xf32>
    %302 = math.exp %301 : vector<2x32xf32>
    %cst_71 = arith.constant 1.000000e+00 : f32
    %303 = vector.broadcast %cst_71 : f32 to vector<2x32xf32>
    %304 = arith.addf %303, %302 : vector<2x32xf32>
    %305 = arith.divf %303, %304 : vector<2x32xf32>
    %306 = vector.extract_strided_slice %293 {offsets = [0, 64], sizes = [2, 32], strides = [1, 1]} : vector<2x128xf32> to vector<2x32xf32>
    %307 = math.tanh %306 : vector<2x32xf32>
    %308 = vector.extract_strided_slice %293 {offsets = [0, 96], sizes = [2, 32], strides = [1, 1]} : vector<2x128xf32> to vector<2x32xf32>
    %309 = arith.negf %308 : vector<2x32xf32>
    %310 = math.exp %309 : vector<2x32xf32>
    %cst_72 = arith.constant 1.000000e+00 : f32
    %311 = vector.broadcast %cst_72 : f32 to vector<2x32xf32>
    %312 = arith.addf %311, %310 : vector<2x32xf32>
    %313 = arith.divf %311, %312 : vector<2x32xf32>
    %314 = arith.mulf %305, %291 : vector<2x32xf32>
    %315 = arith.mulf %299, %307 : vector<2x32xf32>
    %316 = arith.addf %314, %315 : vector<2x32xf32>
    %317 = math.tanh %316 : vector<2x32xf32>
    %318 = arith.mulf %313, %317 : vector<2x32xf32>
    %319 = arith.select %86, %318, %290 : vector<2x32xi1>, vector<2x32xf32>
    %c0_73 = arith.constant 0 : index
    %c0_74 = arith.constant 0 : index
    %320 = vector.load %arg6[%c0_73, %c0_74] : memref<32x32xf32, #tpu.memory_space<vmem>>, vector<32x32xf32>
    %cst_75 = arith.constant dense<0.000000e+00> : vector<2x32xf32>
    %321 = tpu.matmul %319, %320, %cst_75 {dimension_numbers = #tpu.dot_dimension_numbers<[1], [0], [0], [1], [0, 0, 1, 1], [], []>} : vector<2x32xf32>, vector<32x32xf32>, vector<2x32xf32> -> vector<2x32xf32>
    %c0_76 = arith.constant 0 : index
    %c0_77 = arith.constant 0 : index
    %322 = vector.load %arg7[%c0_76, %c0_77] : memref<1x32xf32, #tpu.memory_space<vmem>>, vector<1x32xf32>
    %323 = vector.broadcast %322 : vector<1x32xf32> to vector<2x32xf32>
    %324 = arith.addf %321, %323 : vector<2x32xf32>
    %cst_78 = arith.constant 0.000000e+00 : f32
    %325 = vector.broadcast %cst_78 : f32 to vector<2x32xf32>
    %326 = arith.maximumf %324, %325 : vector<2x32xf32>
    %c0_79 = arith.constant 0 : index
    %c0_80 = arith.constant 0 : index
    %327 = vector.load %arg8[%c0_79, %c0_80] : memref<32x1xf32, #tpu.memory_space<vmem>>, vector<32x1xf32>
    %cst_81 = arith.constant dense<0.000000e+00> : vector<2x1xf32>
    %328 = tpu.matmul %326, %327, %cst_81 {dimension_numbers = #tpu.dot_dimension_numbers<[1], [0], [0], [1], [0, 0, 1, 1], [], []>} : vector<2x32xf32>, vector<32x1xf32>, vector<2x1xf32> -> vector<2x1xf32>
    %c0_82 = arith.constant 0 : index
    %c0_83 = arith.constant 0 : index
    %329 = vector.load %arg9[%c0_82, %c0_83] : memref<1x1xf32, #tpu.memory_space<vmem>>, vector<1x1xf32>
    %330 = vector.broadcast %329 : vector<1x1xf32> to vector<2x1xf32>
    %331 = arith.addf %328, %330 : vector<2x1xf32>
    %c0_84 = arith.constant 0 : index
    %c0_85 = arith.constant 0 : index
    %332 = vector.load %arg11[%c0_84, %c0_85] : memref<2x1xf32, #tpu.memory_space<vmem>>, vector<2x1xf32>
    tpu.vector_store %arg11[%c0_84, %c0_85], %331 {strides = array<i32>} : memref<2x1xf32, #tpu.memory_space<vmem>>, vector<2x1xf32>,
    %c0_86 = arith.constant 0 : index
    %c0_87 = arith.constant 0 : index
    %333 = vector.load %arg2[%c0_86, %c0_87] : memref<2x1xf32, #tpu.memory_space<vmem>>, vector<2x1xf32>
    %334 = arith.subf %331, %333 : vector<2x1xf32>
    %335 = arith.mulf %334, %334 : vector<2x1xf32>
    %cst_88 = arith.constant dense<0.000000e+00> : vector<1xf32>
    %336 = vector.multi_reduction <add>, %335, %cst_88 [0] : vector<2x1xf32> to vector<1xf32>
    %337 = vector.shape_cast %336 : vector<1xf32> to vector<1x1xf32>
    %cst_89 = arith.constant 5.000000e-01 : f32
    %338 = vector.broadcast %cst_89 : f32 to vector<1x1xf32>
    %339 = arith.mulf %337, %338 : vector<1x1xf32>
    %c0_90 = arith.constant 0 : index
    %c0_91 = arith.constant 0 : index
    %340 = vector.load %arg10[%c0_90, %c0_91] : memref<1x1xf32, #tpu.memory_space<vmem>>, vector<1x1xf32>
    tpu.vector_store %arg10[%c0_90, %c0_91], %339 {strides = array<i32>} : memref<1x1xf32, #tpu.memory_space<vmem>>, vector<1x1xf32>,
    return
  }
}

</mosaic_0001>

<llo_original>
// kernel: main_model_forward.1
$region0: #{main_model_forward.1}
  #allocation0 [shape = 'u32[]', space=smem, size = 0x4, offset = 0x4, fixed_abs, tag = 'smem constant byte address 0x4 - core index']
  #allocation1 [shape = 'u32[144,128]{1,0:T(1,128)}', space=vmem, size = 0x12000, scoped, tag = 'internal scratch']
  #allocation2 [shape = 'f32[1,1]{1,0:T(1,128)S(1)}', space=vmem, size = 0x200, scoped, tag = 'scoped memory for main_model_forward.1']
  %s0 = inlined_call_operand.vmem [shape: f32[8,2,16], index: 0, kind: input, shape index: {}]
  %s1 = inlined_call_operand.vmem [shape: s32[2,1], index: 1, kind: input, shape index: {}]
  %s2 = inlined_call_operand.vmem [shape: f32[2,1], index: 2, kind: input, shape index: {}]
  %s3 = inlined_call_operand.vmem [shape: f32[16,128], index: 3, kind: input, shape index: {}]
  %s4 = inlined_call_operand.vmem [shape: f32[32,128], index: 4, kind: input, shape index: {}]
  %s5 = inlined_call_operand.vmem [shape: f32[1,128], index: 5, kind: input, shape index: {}]
  %s6 = inlined_call_operand.vmem [shape: f32[32,32], index: 6, kind: input, shape index: {}]
  %s7 = inlined_call_operand.vmem [shape: f32[1,32], index: 7, kind: input, shape index: {}]
  %s8 = inlined_call_operand.vmem [shape: f32[32,1], index: 8, kind: input, shape index: {}]
  %s9 = inlined_call_operand.<no memory space> [shape: f32[1,1], index: 9, kind: input, shape index: {}]
  %s10 = inlined_call_operand.hbm [shape: f32[1,1], index: 10, kind: output, shape index: {0}]
  %s11 = inlined_call_operand.vmem [shape: f32[2,1], index: 11, kind: output, shape index: {1}]
  %12 = xla_tuple %s10, %s11
  %s13 = sld [smem:[#allocation0]]
  $region58: #{main_model_forward.1} parent=0
    _
  %s15 = ssub.s32 1, %s13
  %s16 = scalar_select 0, %s15, %s13
  %v17 = vstv %s9
  %18 = vst [vmem:[#allocation2] sm:$0x1] %v17
  $region1: #{main_model_forward.1} parent=0
    #allocation3 [shape = 'u8[512]{0}', space=vmem, size = 0x400, scoped, tag = 'output window, operand 0, single buffered']
    #allocation4 [shape = 's32[1]{0}', space=sflag, size = 0x4, scoped, tag = 'scoped memory for main_model_forward.1']
    %19 = vsyncpa [#allocation4], 0
    // Predicated region
    $region2: #{main_model_forward.1} parent=1 // pred_check
      _
    $region3: #{main_model_forward.1} parent=1 // pred_check_branch
      %21 = sbr.rel (0) target = $region5
    $region4: #{main_model_forward.1} parent=1 // pred_region
      _
    $region5: #{main_model_forward.1} parent=1 // pred_fallthru
      _
    // Predicated region
    $region6: #{main_model_forward.1} parent=1 // pred_check
      _
    $region7: #{main_model_forward.1} parent=1 // pred_check_branch
      %23 = sbr.rel (0) target = $region9
    $region8: #{main_model_forward.1} parent=1 // pred_region
      _
    $region9: #{main_model_forward.1} parent=1 // pred_fallthru
      _
    // Predicated region
    $region10: #{main_model_forward.1} parent=1 // pred_check
      _
    $region11: #{main_model_forward.1} parent=1 // pred_check_branch
      %25 = sbr.rel (0) target = $region13
    $region12: #{main_model_forward.1} parent=1 // pred_region
      _
    $region13: #{main_model_forward.1} parent=1 // pred_fallthru
      _
    // Predicated region
    $region14: #{main_model_forward.1} parent=1 // pred_check
      _
    $region15: #{main_model_forward.1} parent=1 // pred_check_branch
      %27 = sbr.rel (0) target = $region17
    $region16: #{main_model_forward.1} parent=1 // pred_region
      _
    $region17: #{main_model_forward.1} parent=1 // pred_fallthru
      _
    // Predicated region
    $region18: #{main_model_forward.1} parent=1 // pred_check
      _
    $region19: #{main_model_forward.1} parent=1 // pred_check_branch
      %29 = sbr.rel (0) target = $region21
    $region20: #{main_model_forward.1} parent=1 // pred_region
      _
    $region21: #{main_model_forward.1} parent=1 // pred_fallthru
      _
    // Predicated region
    $region22: #{main_model_forward.1} parent=1 // pred_check
      _
    $region23: #{main_model_forward.1} parent=1 // pred_check_branch
      %31 = sbr.rel (0) target = $region25
    $region24: #{main_model_forward.1} parent=1 // pred_region
      _
    $region25: #{main_model_forward.1} parent=1 // pred_fallthru
      _
    // Predicated region
    $region26: #{main_model_forward.1} parent=1 // pred_check
      _
    $region27: #{main_model_forward.1} parent=1 // pred_check_branch
      %33 = sbr.rel (0) target = $region29
    $region28: #{main_model_forward.1} parent=1 // pred_region
      _
    $region29: #{main_model_forward.1} parent=1 // pred_fallthru
      _
    // Predicated region
    $region30: #{main_model_forward.1} parent=1 // pred_check
      _
    $region31: #{main_model_forward.1} parent=1 // pred_check_branch
      %35 = sbr.rel (0) target = $region33
    $region32: #{main_model_forward.1} parent=1 // pred_region
      _
    $region33: #{main_model_forward.1} parent=1 // pred_fallthru
      _
    // Predicated region
    $region34: #{main_model_forward.1} parent=1 // pred_check
      _
    $region35: #{main_model_forward.1} parent=1 // pred_check_branch
      %37 = sbr.rel (0) target = $region37
    $region36: #{main_model_forward.1} parent=1 // pred_region
      _
    $region37: #{main_model_forward.1} parent=1 // pred_fallthru
      _
    // Predicated region
    $region38: #{main_model_forward.1} parent=1 // pred_check
      _
    $region39: #{main_model_forward.1} parent=1 // pred_check_branch
      %39 = sbr.rel (0) target = $region41
    $region40: #{main_model_forward.1} parent=1 // pred_region
      _
    $region41: #{main_model_forward.1} parent=1 // pred_fallthru
      _
    %v40 = vld [vmem:[%s1] sm:$0x3]
    %v41 = vld [vmem:[%s3] sm:$0xff]
    %v42 = vld [vmem:[%s3 + $0x8] sm:$0xff]
    %v43 = vld [vmem:[%s4] sm:$0xff]
    %v44 = vld [vmem:[%s4 + $0x8] sm:$0xff]
    %v45 = vld [vmem:[%s4 + $0x10] sm:$0xff]
    %v46 = vld [vmem:[%s4 + $0x18] sm:$0xff]
    %v47 = vld [vmem:[%s5] sm:$0x1]
    %v48 = vld [vmem:[%s0] sm:$0x3]
    %v50 = vlaneseq
    %v51 = vshrl.u32 %v50, 7
    %v52 = vsub.s32 0, %v51
    %v53 = vrot.slane %v47, %v52
    %vm55 = vcmask 130048
    %v57 = vsel %vm55, %v48, 0
    %59 = vmatprep.subr.mxu0 0.0
    %60 = vmatpush1.msra.mxu0 %v41
    %61 = vmatprep.subr.mxu0 0.0
    %62 = vmatpush1.msra.mxu0 %v42
    %63 = vmatprep.subr.mxu0 0.0
    %64 = vmatpush1.msra.mxu0 0.0
    %65 = vmatprep.subr.mxu0 0.0
    %66 = vmatpush1.msra.mxu0 0.0
    %67 = vmatprep.subr.mxu0 0.0
    %68 = vmatpush1.msra.mxu0 0.0
    %69 = vmatprep.subr.mxu0 0.0
    %70 = vmatpush1.msra.mxu0 0.0
    %71 = vmatprep.subr.mxu0 0.0
    %72 = vmatpush1.msra.mxu0 0.0
    %73 = vmatprep.subr.mxu0 0.0
    %74 = vmatpush1.msra.mxu0 0.0
    %75 = vmatprep.subr.mxu0 0.0
    %76 = vmatpush1.msra.mxu0 0.0
    %77 = vmatprep.subr.mxu0 0.0
    %78 = vmatpush1.msra.mxu0 0.0
    %79 = vmatprep.subr.mxu0 0.0
    %80 = vmatpush1.msra.mxu0 0.0
    %81 = vmatprep.subr.mxu0 0.0
    %82 = vmatpush1.msra.mxu0 0.0
    %83 = vmatprep.subr.mxu0 0.0
    %84 = vmatpush1.msra.mxu0 0.0
    %85 = vmatprep.subr.mxu0 0.0
    %86 = vmatpush1.msra.mxu0 0.0
    %87 = vmatprep.subr.mxu0 0.0
    %88 = vmatpush1.msra.mxu0 0.0
    %89 = vmatprep.subr.mxu0 0.0
    %90 = vmatpush1.msra.mxu0 0.0
    %91 = vmatprep.subr.mxu0 0.0
    %92 = vmatpush1.msra.mxu0 0.0
    %93 = vmatprep.subr.mxu0 0.0
    %94 = vmatpush1.msra.mxu0 0.0
    %95 = vmatprep.subr.mxu0 0.0
    %96 = vmatpush1.msra.mxu0 0.0
    %97 = vmatprep.subr.mxu0 0.0
    %98 = vmatpush1.msra.mxu0 0.0
    %99 = vmatprep.subr.mxu0 0.0
    %100 = vmatpush1.msra.mxu0 0.0
    %101 = vmatprep.subr.mxu0 0.0
    %102 = vmatpush1.msra.mxu0 0.0
    %103 = vmatprep.subr.mxu0 0.0
    %104 = vmatpush1.msra.mxu0 0.0
    %105 = vmatprep.subr.mxu0 0.0
    %106 = vmatpush1.msra.mxu0 0.0
    %107 = vmatprep.subr.mxu0 0.0
    %108 = vmatpush1.msra.mxu0 0.0
    %109 = vmatprep.subr.mxu0 0.0
    %110 = vmatpush1.msra.mxu0 0.0
    %111 = vmatprep.subr.mxu0 0.0
    %112 = vmatpush1.msra.mxu0 0.0
    %113 = vmatprep.subr.mxu0 0.0
    %114 = vmatpush1.msra.mxu0 0.0
    %115 = vmatprep.subr.mxu0 0.0
    %116 = vmatpush1.msra.mxu0 0.0
    %117 = vmatprep.subr.mxu0 0.0
    %118 = vmatpush1.msra.mxu0 0.0
    %119 = vmatprep.subr.mxu0 0.0
    %120 = vmatpush1.msra.mxu0 0.0
    %121 = vmatprep.subr.mxu0 0.0
    %122 = vmatpush1.msra.mxu0 0.0
    %123 = vmatprep.mubr.f32.mxu0 0.0
    %124 = vmatmul.mubr.f32.gmra.mrb[0].mxu0 %v57
    %v125 = vpop.f32.mrb[0].mxu0
    %v126 = vadd.f32 %v53, %v125
    %v127 = vpop.f32.mrb[0].mxu0
    %128 = vdwg.mxu0
    %s129 = scalar_lea.vmem %s0, 2
    %v130 = vld [vmem:[%s129] sm:$0x3]
    %v132 = vsel %vm55, %v130, 0
    %134 = vmatprep.subr.mxu0 0.0
    %135 = vmatpush1.msra.mxu0 %v41
    %136 = vmatprep.subr.mxu0 0.0
    %137 = vmatpush1.msra.mxu0 %v42
    %138 = vmatprep.subr.mxu0 0.0
    %139 = vmatpush1.msra.mxu0 0.0
    %140 = vmatprep.subr.mxu0 0.0
    %141 = vmatpush1.msra.mxu0 0.0
    %142 = vmatprep.subr.mxu0 0.0
    %143 = vmatpush1.msra.mxu0 0.0
    %144 = vmatprep.subr.mxu0 0.0
    %145 = vmatpush1.msra.mxu0 0.0
    %146 = vmatprep.subr.mxu0 0.0
    %147 = vmatpush1.msra.mxu0 0.0
    %148 = vmatprep.subr.mxu0 0.0
    %149 = vmatpush1.msra.mxu0 0.0
    %150 = vmatprep.subr.mxu0 0.0
    %151 = vmatpush1.msra.mxu0 0.0
    %152 = vmatprep.subr.mxu0 0.0
    %153 = vmatpush1.msra.mxu0 0.0
    %154 = vmatprep.subr.mxu0 0.0
    %155 = vmatpush1.msra.mxu0 0.0
    %156 = vmatprep.subr.mxu0 0.0
    %157 = vmatpush1.msra.mxu0 0.0
    %158 = vmatprep.subr.mxu0 0.0
    %159 = vmatpush1.msra.mxu0 0.0
    %160 = vmatprep.subr.mxu0 0.0
    %161 = vmatpush1.msra.mxu0 0.0
    %162 = vmatprep.subr.mxu0 0.0
    %163 = vmatpush1.msra.mxu0 0.0
    %164 = vmatprep.subr.mxu0 0.0
    %165 = vmatpush1.msra.mxu0 0.0
    %166 = vmatprep.subr.mxu0 0.0
    %167 = vmatpush1.msra.mxu0 0.0
    %168 = vmatprep.subr.mxu0 0.0
    %169 = vmatpush1.msra.mxu0 0.0
    %170 = vmatprep.subr.mxu0 0.0
    %171 = vmatpush1.msra.mxu0 0.0
    %172 = vmatprep.subr.mxu0 0.0
    %173 = vmatpush1.msra.mxu0 0.0
    %174 = vmatprep.subr.mxu0 0.0
    %175 = vmatpush1.msra.mxu0 0.0
    %176 = vmatprep.subr.mxu0 0.0
    %177 = vmatpush1.msra.mxu0 0.0
    %178 = vmatprep.subr.mxu0 0.0
    %179 = vmatpush1.msra.mxu0 0.0
    %180 = vmatprep.subr.mxu0 0.0
    %181 = vmatpush1.msra.mxu0 0.0
    %182 = vmatprep.subr.mxu0 0.0
    %183 = vmatpush1.msra.mxu0 0.0
    %184 = vmatprep.subr.mxu0 0.0
    %185 = vmatpush1.msra.mxu0 0.0
    %186 = vmatprep.subr.mxu0 0.0
    %187 = vmatpush1.msra.mxu0 0.0
    %188 = vmatprep.subr.mxu0 0.0
    %189 = vmatpush1.msra.mxu0 0.0
    %190 = vmatprep.subr.mxu0 0.0
    %191 = vmatpush1.msra.mxu0 0.0
    %192 = vmatprep.subr.mxu0 0.0
    %193 = vmatpush1.msra.mxu0 0.0
    %194 = vmatprep.subr.mxu0 0.0
    %195 = vmatpush1.msra.mxu0 0.0
    %196 = vmatprep.subr.mxu0 0.0
    %197 = vmatpush1.msra.mxu0 0.0
    %198 = vmatprep.mubr.f32.mxu0 0.0
    %199 = vmatmul.mubr.f32.gmra.mrb[0].mxu0 %v132
    %v200 = vpop.f32.mrb[0].mxu0
    %v201 = vadd.f32 %v53, %v200
    %v202 = vpop.f32.mrb[0].mxu0
    %203 = vdwg.mxu0
    %s204 = scalar_lea.vmem %s0, 4
    %v205 = vld [vmem:[%s204] sm:$0x3]
    %v207 = vsel %vm55, %v205, 0
    %209 = vmatprep.subr.mxu0 0.0
    %210 = vmatpush1.msra.mxu0 %v41
    %211 = vmatprep.subr.mxu0 0.0
    %212 = vmatpush1.msra.mxu0 %v42
    %213 = vmatprep.subr.mxu0 0.0
    %214 = vmatpush1.msra.mxu0 0.0
    %215 = vmatprep.subr.mxu0 0.0
    %216 = vmatpush1.msra.mxu0 0.0
    %217 = vmatprep.subr.mxu0 0.0
    %218 = vmatpush1.msra.mxu0 0.0
    %219 = vmatprep.subr.mxu0 0.0
    %220 = vmatpush1.msra.mxu0 0.0
    %221 = vmatprep.subr.mxu0 0.0
    %222 = vmatpush1.msra.mxu0 0.0
    %223 = vmatprep.subr.mxu0 0.0
    %224 = vmatpush1.msra.mxu0 0.0
    %225 = vmatprep.subr.mxu0 0.0
    %226 = vmatpush1.msra.mxu0 0.0
    %227 = vmatprep.subr.mxu0 0.0
    %228 = vmatpush1.msra.mxu0 0.0
    %229 = vmatprep.subr.mxu0 0.0
    %230 = vmatpush1.msra.mxu0 0.0
    %231 = vmatprep.subr.mxu0 0.0
    %232 = vmatpush1.msra.mxu0 0.0
    %233 = vmatprep.subr.mxu0 0.0
    %234 = vmatpush1.msra.mxu0 0.0
    %235 = vmatprep.subr.mxu0 0.0
    %236 = vmatpush1.msra.mxu0 0.0
    %237 = vmatprep.subr.mxu0 0.0
    %238 = vmatpush1.msra.mxu0 0.0
    %239 = vmatprep.subr.mxu0 0.0
    %240 = vmatpush1.msra.mxu0 0.0
    %241 = vmatprep.subr.mxu0 0.0
    %242 = vmatpush1.msra.mxu0 0.0
    %243 = vmatprep.subr.mxu0 0.0
    %244 = vmatpush1.msra.mxu0 0.0
    %245 = vmatprep.subr.mxu0 0.0
    %246 = vmatpush1.msra.mxu0 0.0
    %247 = vmatprep.subr.mxu0 0.0
    %248 = vmatpush1.msra.mxu0 0.0
    %249 = vmatprep.subr.mxu0 0.0
    %250 = vmatpush1.msra.mxu0 0.0
    %251 = vmatprep.subr.mxu0 0.0
    %252 = vmatpush1.msra.mxu0 0.0
    %253 = vmatprep.subr.mxu0 0.0
    %254 = vmatpush1.msra.mxu0 0.0
    %255 = vmatprep.subr.mxu0 0.0
    %256 = vmatpush1.msra.mxu0 0.0
    %257 = vmatprep.subr.mxu0 0.0
    %258 = vmatpush1.msra.mxu0 0.0
    %259 = vmatprep.subr.mxu0 0.0
    %260 = vmatpush1.msra.mxu0 0.0
    %261 = vmatprep.subr.mxu0 0.0
    %262 = vmatpush1.msra.mxu0 0.0
    %263 = vmatprep.subr.mxu0 0.0
    %264 = vmatpush1.msra.mxu0 0.0
    %265 = vmatprep.subr.mxu0 0.0
    %266 = vmatpush1.msra.mxu0 0.0
    %267 = vmatprep.subr.mxu0 0.0
    %268 = vmatpush1.msra.mxu0 0.0
    %269 = vmatprep.subr.mxu0 0.0
    %270 = vmatpush1.msra.mxu0 0.0
    %271 = vmatprep.subr.mxu0 0.0
    %272 = vmatpush1.msra.mxu0 0.0
    %273 = vmatprep.mubr.f32.mxu0 0.0
    %274 = vmatmul.mubr.f32.gmra.mrb[0].mxu0 %v207
    %v275 = vpop.f32.mrb[0].mxu0
    %v276 = vadd.f32 %v53, %v275
    %v277 = vpop.f32.mrb[0].mxu0
    %278 = vdwg.mxu0
    %s279 = scalar_lea.vmem %s0, 6
    %v280 = vld [vmem:[%s279] sm:$0x3]
    %v282 = vsel %vm55, %v280, 0
    %284 = vmatprep.subr.mxu0 0.0
    %285 = vmatpush1.msra.mxu0 %v41
    %286 = vmatprep.subr.mxu0 0.0
    %287 = vmatpush1.msra.mxu0 %v42
    %288 = vmatprep.subr.mxu0 0.0
    %289 = vmatpush1.msra.mxu0 0.0
    %290 = vmatprep.subr.mxu0 0.0
    %291 = vmatpush1.msra.mxu0 0.0
    %292 = vmatprep.subr.mxu0 0.0
    %293 = vmatpush1.msra.mxu0 0.0
    %294 = vmatprep.subr.mxu0 0.0
    %295 = vmatpush1.msra.mxu0 0.0
    %296 = vmatprep.subr.mxu0 0.0
    %297 = vmatpush1.msra.mxu0 0.0
    %298 = vmatprep.subr.mxu0 0.0
    %299 = vmatpush1.msra.mxu0 0.0
    %300 = vmatprep.subr.mxu0 0.0
    %301 = vmatpush1.msra.mxu0 0.0
    %302 = vmatprep.subr.mxu0 0.0
    %303 = vmatpush1.msra.mxu0 0.0
    %304 = vmatprep.subr.mxu0 0.0
    %305 = vmatpush1.msra.mxu0 0.0
    %306 = vmatprep.subr.mxu0 0.0
    %307 = vmatpush1.msra.mxu0 0.0
    %308 = vmatprep.subr.mxu0 0.0
    %309 = vmatpush1.msra.mxu0 0.0
    %310 = vmatprep.subr.mxu0 0.0
    %311 = vmatpush1.msra.mxu0 0.0
    %312 = vmatprep.subr.mxu0 0.0
    %313 = vmatpush1.msra.mxu0 0.0
    %314 = vmatprep.subr.mxu0 0.0
    %315 = vmatpush1.msra.mxu0 0.0
    %316 = vmatprep.subr.mxu0 0.0
    %317 = vmatpush1.msra.mxu0 0.0
    %318 = vmatprep.subr.mxu0 0.0
    %319 = vmatpush1.msra.mxu0 0.0
    %320 = vmatprep.subr.mxu0 0.0
    %321 = vmatpush1.msra.mxu0 0.0
    %322 = vmatprep.subr.mxu0 0.0
    %323 = vmatpush1.msra.mxu0 0.0
    %324 = vmatprep.subr.mxu0 0.0
    %325 = vmatpush1.msra.mxu0 0.0
    %326 = vmatprep.subr.mxu0 0.0
    %327 = vmatpush1.msra.mxu0 0.0
    %328 = vmatprep.subr.mxu0 0.0
    %329 = vmatpush1.msra.mxu0 0.0
    %330 = vmatprep.subr.mxu0 0.0
    %331 = vmatpush1.msra.mxu0 0.0
    %332 = vmatprep.subr.mxu0 0.0
    %333 = vmatpush1.msra.mxu0 0.0
    %334 = vmatprep.subr.mxu0 0.0
    %335 = vmatpush1.msra.mxu0 0.0
    %336 = vmatprep.subr.mxu0 0.0
    %337 = vmatpush1.msra.mxu0 0.0
    %338 = vmatprep.subr.mxu0 0.0
    %339 = vmatpush1.msra.mxu0 0.0
    %340 = vmatprep.subr.mxu0 0.0
    %341 = vmatpush1.msra.mxu0 0.0
    %342 = vmatprep.subr.mxu0 0.0
    %343 = vmatpush1.msra.mxu0 0.0
    %344 = vmatprep.subr.mxu0 0.0
    %345 = vmatpush1.msra.mxu0 0.0
    %346 = vmatprep.subr.mxu0 0.0
    %347 = vmatpush1.msra.mxu0 0.0
    %348 = vmatprep.mubr.f32.mxu0 0.0
    %349 = vmatmul.mubr.f32.gmra.mrb[0].mxu0 %v282
    %v350 = vpop.f32.mrb[0].mxu0
    %v351 = vadd.f32 %v53, %v350
    %v352 = vpop.f32.mrb[0].mxu0
    %353 = vdwg.mxu0
    %s354 = scalar_lea.vmem %s0, 8
    %v355 = vld [vmem:[%s354] sm:$0x3]
    %v357 = vsel %vm55, %v355, 0
    %359 = vmatprep.subr.mxu0 0.0
    %360 = vmatpush1.msra.mxu0 %v41
    %361 = vmatprep.subr.mxu0 0.0
    %362 = vmatpush1.msra.mxu0 %v42
    %363 = vmatprep.subr.mxu0 0.0
    %364 = vmatpush1.msra.mxu0 0.0
    %365 = vmatprep.subr.mxu0 0.0
    %366 = vmatpush1.msra.mxu0 0.0
    %367 = vmatprep.subr.mxu0 0.0
    %368 = vmatpush1.msra.mxu0 0.0
    %369 = vmatprep.subr.mxu0 0.0
    %370 = vmatpush1.msra.mxu0 0.0
    %371 = vmatprep.subr.mxu0 0.0
    %372 = vmatpush1.msra.mxu0 0.0
    %373 = vmatprep.subr.mxu0 0.0
    %374 = vmatpush1.msra.mxu0 0.0
    %375 = vmatprep.subr.mxu0 0.0
    %376 = vmatpush1.msra.mxu0 0.0
    %377 = vmatprep.subr.mxu0 0.0
    %378 = vmatpush1.msra.mxu0 0.0
    %379 = vmatprep.subr.mxu0 0.0
    %380 = vmatpush1.msra.mxu0 0.0
    %381 = vmatprep.subr.mxu0 0.0
    %382 = vmatpush1.msra.mxu0 0.0
    %383 = vmatprep.subr.mxu0 0.0
    %384 = vmatpush1.msra.mxu0 0.0
    %385 = vmatprep.subr.mxu0 0.0
    %386 = vmatpush1.msra.mxu0 0.0
    %387 = vmatprep.subr.mxu0 0.0
    %388 = vmatpush1.msra.mxu0 0.0
    %389 = vmatprep.subr.mxu0 0.0
    %390 = vmatpush1.msra.mxu0 0.0
    %391 = vmatprep.subr.mxu0 0.0
    %392 = vmatpush1.msra.mxu0 0.0
    %393 = vmatprep.subr.mxu0 0.0
    %394 = vmatpush1.msra.mxu0 0.0
    %395 = vmatprep.subr.mxu0 0.0
    %396 = vmatpush1.msra.mxu0 0.0
    %397 = vmatprep.subr.mxu0 0.0
    %398 = vmatpush1.msra.mxu0 0.0
    %399 = vmatprep.subr.mxu0 0.0
    %400 = vmatpush1.msra.mxu0 0.0
    %401 = vmatprep.subr.mxu0 0.0
    %402 = vmatpush1.msra.mxu0 0.0
    %403 = vmatprep.subr.mxu0 0.0
    %404 = vmatpush1.msra.mxu0 0.0
    %405 = vmatprep.subr.mxu0 0.0
    %406 = vmatpush1.msra.mxu0 0.0
    %407 = vmatprep.subr.mxu0 0.0
    %408 = vmatpush1.msra.mxu0 0.0
    %409 = vmatprep.subr.mxu0 0.0
    %410 = vmatpush1.msra.mxu0 0.0
    %411 = vmatprep.subr.mxu0 0.0
    %412 = vmatpush1.msra.mxu0 0.0
    %413 = vmatprep.subr.mxu0 0.0
    %414 = vmatpush1.msra.mxu0 0.0
    %415 = vmatprep.subr.mxu0 0.0
    %416 = vmatpush1.msra.mxu0 0.0
    %417 = vmatprep.subr.mxu0 0.0
    %418 = vmatpush1.msra.mxu0 0.0
    %419 = vmatprep.subr.mxu0 0.0
    %420 = vmatpush1.msra.mxu0 0.0
    %421 = vmatprep.subr.mxu0 0.0
    %422 = vmatpush1.msra.mxu0 0.0
    %423 = vmatprep.mubr.f32.mxu0 0.0
    %424 = vmatmul.mubr.f32.gmra.mrb[0].mxu0 %v357
    %v425 = vpop.f32.mrb[0].mxu0
    %v426 = vadd.f32 %v53, %v425
    %v427 = vpop.f32.mrb[0].mxu0
    %428 = vdwg.mxu0
    %s429 = scalar_lea.vmem %s0, 10
    %v430 = vld [vmem:[%s429] sm:$0x3]
    %v432 = vsel %vm55, %v430, 0
    %434 = vmatprep.subr.mxu0 0.0
    %435 = vmatpush1.msra.mxu0 %v41
    %436 = vmatprep.subr.mxu0 0.0
    %437 = vmatpush1.msra.mxu0 %v42
    %438 = vmatprep.subr.mxu0 0.0
    %439 = vmatpush1.msra.mxu0 0.0
    %440 = vmatprep.subr.mxu0 0.0
    %441 = vmatpush1.msra.mxu0 0.0
    %442 = vmatprep.subr.mxu0 0.0
    %443 = vmatpush1.msra.mxu0 0.0
    %444 = vmatprep.subr.mxu0 0.0
    %445 = vmatpush1.msra.mxu0 0.0
    %446 = vmatprep.subr.mxu0 0.0
    %447 = vmatpush1.msra.mxu0 0.0
    %448 = vmatprep.subr.mxu0 0.0
    %449 = vmatpush1.msra.mxu0 0.0
    %450 = vmatprep.subr.mxu0 0.0
    %451 = vmatpush1.msra.mxu0 0.0
    %452 = vmatprep.subr.mxu0 0.0
    %453 = vmatpush1.msra.mxu0 0.0
    %454 = vmatprep.subr.mxu0 0.0
    %455 = vmatpush1.msra.mxu0 0.0
    %456 = vmatprep.subr.mxu0 0.0
    %457 = vmatpush1.msra.mxu0 0.0
    %458 = vmatprep.subr.mxu0 0.0
    %459 = vmatpush1.msra.mxu0 0.0
    %460 = vmatprep.subr.mxu0 0.0
    %461 = vmatpush1.msra.mxu0 0.0
    %462 = vmatprep.subr.mxu0 0.0
    %463 = vmatpush1.msra.mxu0 0.0
    %464 = vmatprep.subr.mxu0 0.0
    %465 = vmatpush1.msra.mxu0 0.0
    %466 = vmatprep.subr.mxu0 0.0
    %467 = vmatpush1.msra.mxu0 0.0
    %468 = vmatprep.subr.mxu0 0.0
    %469 = vmatpush1.msra.mxu0 0.0
    %470 = vmatprep.subr.mxu0 0.0
    %471 = vmatpush1.msra.mxu0 0.0
    %472 = vmatprep.subr.mxu0 0.0
    %473 = vmatpush1.msra.mxu0 0.0
    %474 = vmatprep.subr.mxu0 0.0
    %475 = vmatpush1.msra.mxu0 0.0
    %476 = vmatprep.subr.mxu0 0.0
    %477 = vmatpush1.msra.mxu0 0.0
    %478 = vmatprep.subr.mxu0 0.0
    %479 = vmatpush1.msra.mxu0 0.0
    %480 = vmatprep.subr.mxu0 0.0
    %481 = vmatpush1.msra.mxu0 0.0
    %482 = vmatprep.subr.mxu0 0.0
    %483 = vmatpush1.msra.mxu0 0.0
    %484 = vmatprep.subr.mxu0 0.0
    %485 = vmatpush1.msra.mxu0 0.0
    %486 = vmatprep.subr.mxu0 0.0
    %487 = vmatpush1.msra.mxu0 0.0
    %488 = vmatprep.subr.mxu0 0.0
    %489 = vmatpush1.msra.mxu0 0.0
    %490 = vmatprep.subr.mxu0 0.0
    %491 = vmatpush1.msra.mxu0 0.0
    %492 = vmatprep.subr.mxu0 0.0
    %493 = vmatpush1.msra.mxu0 0.0
    %494 = vmatprep.subr.mxu0 0.0
    %495 = vmatpush1.msra.mxu0 0.0
    %496 = vmatprep.subr.mxu0 0.0
    %497 = vmatpush1.msra.mxu0 0.0
    %498 = vmatprep.mubr.f32.mxu0 0.0
    %499 = vmatmul.mubr.f32.gmra.mrb[0].mxu0 %v432
    %v500 = vpop.f32.mrb[0].mxu0
    %v501 = vadd.f32 %v53, %v500
    %v502 = vpop.f32.mrb[0].mxu0
    %503 = vdwg.mxu0
    %s504 = scalar_lea.vmem %s0, 12
    %v505 = vld [vmem:[%s504] sm:$0x3]
    %v507 = vsel %vm55, %v505, 0
    %509 = vmatprep.subr.mxu0 0.0
    %510 = vmatpush1.msra.mxu0 %v41
    %511 = vmatprep.subr.mxu0 0.0
    %512 = vmatpush1.msra.mxu0 %v42
    %513 = vmatprep.subr.mxu0 0.0
    %514 = vmatpush1.msra.mxu0 0.0
    %515 = vmatprep.subr.mxu0 0.0
    %516 = vmatpush1.msra.mxu0 0.0
    %517 = vmatprep.subr.mxu0 0.0
    %518 = vmatpush1.msra.mxu0 0.0
    %519 = vmatprep.subr.mxu0 0.0
    %520 = vmatpush1.msra.mxu0 0.0
    %521 = vmatprep.subr.mxu0 0.0
    %522 = vmatpush1.msra.mxu0 0.0
    %523 = vmatprep.subr.mxu0 0.0
    %524 = vmatpush1.msra.mxu0 0.0
    %525 = vmatprep.subr.mxu0 0.0
    %526 = vmatpush1.msra.mxu0 0.0
    %527 = vmatprep.subr.mxu0 0.0
    %528 = vmatpush1.msra.mxu0 0.0
    %529 = vmatprep.subr.mxu0 0.0
    %530 = vmatpush1.msra.mxu0 0.0
    %531 = vmatprep.subr.mxu0 0.0
    %532 = vmatpush1.msra.mxu0 0.0
    %533 = vmatprep.subr.mxu0 0.0
    %534 = vmatpush1.msra.mxu0 0.0
    %535 = vmatprep.subr.mxu0 0.0
    %536 = vmatpush1.msra.mxu0 0.0
    %537 = vmatprep.subr.mxu0 0.0
    %538 = vmatpush1.msra.mxu0 0.0
    %539 = vmatprep.subr.mxu0 0.0
    %540 = vmatpush1.msra.mxu0 0.0
    %541 = vmatprep.subr.mxu0 0.0
    %542 = vmatpush1.msra.mxu0 0.0
    %543 = vmatprep.subr.mxu0 0.0
    %544 = vmatpush1.msra.mxu0 0.0
    %545 = vmatprep.subr.mxu0 0.0
    %546 = vmatpush1.msra.mxu0 0.0
    %547 = vmatprep.subr.mxu0 0.0
    %548 = vmatpush1.msra.mxu0 0.0
    %549 = vmatprep.subr.mxu0 0.0
    %550 = vmatpush1.msra.mxu0 0.0
    %551 = vmatprep.subr.mxu0 0.0
    %552 = vmatpush1.msra.mxu0 0.0
    %553 = vmatprep.subr.mxu0 0.0
    %554 = vmatpush1.msra.mxu0 0.0
    %555 = vmatprep.subr.mxu0 0.0
    %556 = vmatpush1.msra.mxu0 0.0
    %557 = vmatprep.subr.mxu0 0.0
    %558 = vmatpush1.msra.mxu0 0.0
    %559 = vmatprep.subr.mxu0 0.0
    %560 = vmatpush1.msra.mxu0 0.0
    %561 = vmatprep.subr.mxu0 0.0
    %562 = vmatpush1.msra.mxu0 0.0
    %563 = vmatprep.subr.mxu0 0.0
    %564 = vmatpush1.msra.mxu0 0.0
    %565 = vmatprep.subr.mxu0 0.0
    %566 = vmatpush1.msra.mxu0 0.0
    %567 = vmatprep.subr.mxu0 0.0
    %568 = vmatpush1.msra.mxu0 0.0
    %569 = vmatprep.subr.mxu0 0.0
    %570 = vmatpush1.msra.mxu0 0.0
    %571 = vmatprep.subr.mxu0 0.0
    %572 = vmatpush1.msra.mxu0 0.0
    %573 = vmatprep.mubr.f32.mxu0 0.0
    %574 = vmatmul.mubr.f32.gmra.mrb[0].mxu0 %v507
    %v575 = vpop.f32.mrb[0].mxu0
    %v576 = vadd.f32 %v53, %v575
    %v577 = vpop.f32.mrb[0].mxu0
    %578 = vdwg.mxu0
    %s579 = scalar_lea.vmem %s0, 14
    %v580 = vld [vmem:[%s579] sm:$0x3]
    %v582 = vsel %vm55, %v580, 0
    %584 = vmatprep.subr.mxu0 0.0
    %585 = vmatpush1.msra.mxu0 %v41
    %586 = vmatprep.subr.mxu0 0.0
    %587 = vmatpush1.msra.mxu0 %v42
    %588 = vmatprep.subr.mxu0 0.0
    %589 = vmatpush1.msra.mxu0 0.0
    %590 = vmatprep.subr.mxu0 0.0
    %591 = vmatpush1.msra.mxu0 0.0
    %592 = vmatprep.subr.mxu0 0.0
    %593 = vmatpush1.msra.mxu0 0.0
    %594 = vmatprep.subr.mxu0 0.0
    %595 = vmatpush1.msra.mxu0 0.0
    %596 = vmatprep.subr.mxu0 0.0
    %597 = vmatpush1.msra.mxu0 0.0
    %598 = vmatprep.subr.mxu0 0.0
    %599 = vmatpush1.msra.mxu0 0.0
    %600 = vmatprep.subr.mxu0 0.0
    %601 = vmatpush1.msra.mxu0 0.0
    %602 = vmatprep.subr.mxu0 0.0
    %603 = vmatpush1.msra.mxu0 0.0
    %604 = vmatprep.subr.mxu0 0.0
    %605 = vmatpush1.msra.mxu0 0.0
    %606 = vmatprep.subr.mxu0 0.0
    %607 = vmatpush1.msra.mxu0 0.0
    %608 = vmatprep.subr.mxu0 0.0
    %609 = vmatpush1.msra.mxu0 0.0
    %610 = vmatprep.subr.mxu0 0.0
    %611 = vmatpush1.msra.mxu0 0.0
    %612 = vmatprep.subr.mxu0 0.0
    %613 = vmatpush1.msra.mxu0 0.0
    %614 = vmatprep.subr.mxu0 0.0
    %615 = vmatpush1.msra.mxu0 0.0
    %616 = vmatprep.subr.mxu0 0.0
    %617 = vmatpush1.msra.mxu0 0.0
    %618 = vmatprep.subr.mxu0 0.0
    %619 = vmatpush1.msra.mxu0 0.0
    %620 = vmatprep.subr.mxu0 0.0
    %621 = vmatpush1.msra.mxu0 0.0
    %622 = vmatprep.subr.mxu0 0.0
    %623 = vmatpush1.msra.mxu0 0.0
    %624 = vmatprep.subr.mxu0 0.0
    %625 = vmatpush1.msra.mxu0 0.0
    %626 = vmatprep.subr.mxu0 0.0
    %627 = vmatpush1.msra.mxu0 0.0
    %628 = vmatprep.subr.mxu0 0.0
    %629 = vmatpush1.msra.mxu0 0.0
    %630 = vmatprep.subr.mxu0 0.0
    %631 = vmatpush1.msra.mxu0 0.0
    %632 = vmatprep.subr.mxu0 0.0
    %633 = vmatpush1.msra.mxu0 0.0
    %634 = vmatprep.subr.mxu0 0.0
    %635 = vmatpush1.msra.mxu0 0.0
    %636 = vmatprep.subr.mxu0 0.0
    %637 = vmatpush1.msra.mxu0 0.0
    %638 = vmatprep.subr.mxu0 0.0
    %639 = vmatpush1.msra.mxu0 0.0
    %640 = vmatprep.subr.mxu0 0.0
    %641 = vmatpush1.msra.mxu0 0.0
    %642 = vmatprep.subr.mxu0 0.0
    %643 = vmatpush1.msra.mxu0 0.0
    %644 = vmatprep.subr.mxu0 0.0
    %645 = vmatpush1.msra.mxu0 0.0
    %646 = vmatprep.subr.mxu0 0.0
    %647 = vmatpush1.msra.mxu0 0.0
    %648 = vmatprep.mubr.f32.mxu0 0.0
    %649 = vmatmul.mubr.f32.gmra.mrb[0].mxu0 %v582
    %v650 = vpop.f32.mrb[0].mxu0
    %v651 = vadd.f32 %v53, %v650
    %v652 = vpop.f32.mrb[0].mxu0
    %653 = vdwg.mxu0
    %v654 = vlaneseq
    %v655 = vand.u32 %v654, 127
    %vm656 = vcmp.lt.s32.totalorder %v655, 16
    %v657 = vsel %vm656, 0, 7
    %658 = vset.pattern.permute.xlu0 0
    %659 = vperm.xlu0 %658, %v40
    %v660 = vpop.permute.xlu0 %659
    %vm661 = vcmp.lt.s32.totalorder %v657, %v660
    %v662 = vsel %vm656, 1, 6
    %vm663 = vcmp.lt.s32.totalorder %v662, %v660
    %v664 = vsel %vm656, 2, 5
    %vm665 = vcmp.lt.s32.totalorder %v664, %v660
    %v666 = vsel %vm656, 3, 4
    %vm667 = vcmp.lt.s32.totalorder %v666, %v660
    %v668 = vsel %vm656, 4, 3
    %vm669 = vcmp.lt.s32.totalorder %v668, %v660
    %v670 = vsel %vm656, 5, 2
    %vm671 = vcmp.lt.s32.totalorder %v670, %v660
    %v672 = vsel %vm656, 6, 1
    %vm673 = vcmp.lt.s32.totalorder %v672, %v660
    %v674 = vsel %vm656, 7, 0
    %vm675 = vcmp.lt.s32.totalorder %v674, %v660
    %vm676 = vcmask 261120
    %v678 = vsel %vm676, 0.0, 0
    %680 = vmatprep.subr.mxu0 0.0
    %681 = vmatpush1.msra.mxu0 %v43
    %682 = vmatprep.subr.mxu0 0.0
    %683 = vmatpush1.msra.mxu0 %v44
    %684 = vmatprep.subr.mxu0 0.0
    %685 = vmatpush1.msra.mxu0 %v45
    %686 = vmatprep.subr.mxu0 0.0
    %687 = vmatpush1.msra.mxu0 %v46
    %688 = vmatprep.subr.mxu0 0.0
    %689 = vmatpush1.msra.mxu0 0.0
    %690 = vmatprep.subr.mxu0 0.0
    %691 = vmatpush1.msra.mxu0 0.0
    %692 = vmatprep.subr.mxu0 0.0
    %693 = vmatpush1.msra.mxu0 0.0
    %694 = vmatprep.subr.mxu0 0.0
    %695 = vmatpush1.msra.mxu0 0.0
    %696 = vmatprep.subr.mxu0 0.0
    %697 = vmatpush1.msra.mxu0 0.0
    %698 = vmatprep.subr.mxu0 0.0
    %699 = vmatpush1.msra.mxu0 0.0
    %700 = vmatprep.subr.mxu0 0.0
    %701 = vmatpush1.msra.mxu0 0.0
    %702 = vmatprep.subr.mxu0 0.0
    %703 = vmatpush1.msra.mxu0 0.0
    %704 = vmatprep.subr.mxu0 0.0
    %705 = vmatpush1.msra.mxu0 0.0
    %706 = vmatprep.subr.mxu0 0.0
    %707 = vmatpush1.msra.mxu0 0.0
    %708 = vmatprep.subr.mxu0 0.0
    %709 = vmatpush1.msra.mxu0 0.0
    %710 = vmatprep.subr.mxu0 0.0
    %711 = vmatpush1.msra.mxu0 0.0
    %712 = vmatprep.subr.mxu0 0.0
    %713 = vmatpush1.msra.mxu0 0.0
    %714 = vmatprep.subr.mxu0 0.0
    %715 = vmatpush1.msra.mxu0 0.0
    %716 = vmatprep.subr.mxu0 0.0
    %717 = vmatpush1.msra.mxu0 0.0
    %718 = vmatprep.subr.mxu0 0.0
    %719 = vmatpush1.msra.mxu0 0.0
    %720 = vmatprep.subr.mxu0 0.0
    %721 = vmatpush1.msra.mxu0 0.0
    %722 = vmatprep.subr.mxu0 0.0
    %723 = vmatpush1.msra.mxu0 0.0
    %724 = vmatprep.subr.mxu0 0.0
    %725 = vmatpush1.msra.mxu0 0.0
    %726 = vmatprep.subr.mxu0 0.0
    %727 = vmatpush1.msra.mxu0 0.0
    %728 = vmatprep.subr.mxu0 0.0
    %729 = vmatpush1.msra.mxu0 0.0
    %730 = vmatprep.subr.mxu0 0.0
    %731 = vmatpush1.msra.mxu0 0.0
    %732 = vmatprep.subr.mxu0 0.0
    %733 = vmatpush1.msra.mxu0 0.0
    %734 = vmatprep.subr.mxu0 0.0
    %735 = vmatpush1.msra.mxu0 0.0
    %736 = vmatprep.subr.mxu0 0.0
    %737 = vmatpush1.msra.mxu0 0.0
    %738 = vmatprep.subr.mxu0 0.0
    %739 = vmatpush1.msra.mxu0 0.0
    %740 = vmatprep.subr.mxu0 0.0
    %741 = vmatpush1.msra.mxu0 0.0
    %742 = vmatprep.subr.mxu0 0.0
    %743 = vmatpush1.msra.mxu0 0.0
    %744 = vmatprep.mubr.f32.mxu0 0.0
    %745 = vmatmul.mubr.f32.gmra.mrb[0].mxu0 %v678
    %v746 = vpop.f32.mrb[0].mxu0
    %v747 = vadd.f32 0.0, %v746
    %v748 = vpop.f32.mrb[0].mxu0
    %749 = vdwg.mxu0
    %v750 = vadd.f32 %v126, %v747
    %v751 = vxor.u32 %v750, 2147483648
    %v752 = vmul.f32 %v751, 1.442695
    %v753 = vpow.pop %v752
    %v754 = vadd.f32 %v753, 1.0
    %v755 = vrcp.pop %v754
    %v756 = vmul.f32 1.0, %v755
    %v757 = vtanh.pop %v750
    %v758 = vmul.f32 %v756, 0.0
    %760 = vrot.lane.b32.xlu0 %v757, 64
    %v761 = vpop.permute.xlu0 %760
    %v763 = vmul.f32 %v756, %v761
    %765 = vrot.lane.b32.xlu0 %v763, 32
    %v766 = vpop.permute.xlu0 %765
    %v768 = vadd.f32 %v758, %v766
    %v769 = vtanh.pop %v768
    %771 = vrot.lane.b32.xlu0 %v769, 64
    %v772 = vpop.permute.xlu0 %771
    %v774 = vmul.f32 %v756, %v772
    %776 = vrot.lane.b32.xlu0 %v774, 32
    %v777 = vpop.permute.xlu0 %776
    %v779 = vsel %vm661, %v777, 0.0
    %781 = vrot.lane.b32.xlu0 %v768, 96
    %v782 = vpop.permute.xlu0 %781
    %v784 = vsel %vm661, %v782, 0.0
    %v786 = vsel %vm676, %v779, 0
    %788 = vmatprep.subr.mxu0 0.0
    %789 = vmatpush1.msra.mxu0 %v43
    %790 = vmatprep.subr.mxu0 0.0
    %791 = vmatpush1.msra.mxu0 %v44
    %792 = vmatprep.subr.mxu0 0.0
    %793 = vmatpush1.msra.mxu0 %v45
    %794 = vmatprep.subr.mxu0 0.0
    %795 = vmatpush1.msra.mxu0 %v46
    %796 = vmatprep.subr.mxu0 0.0
    %797 = vmatpush1.msra.mxu0 0.0
    %798 = vmatprep.subr.mxu0 0.0
    %799 = vmatpush1.msra.mxu0 0.0
    %800 = vmatprep.subr.mxu0 0.0
    %801 = vmatpush1.msra.mxu0 0.0
    %802 = vmatprep.subr.mxu0 0.0
    %803 = vmatpush1.msra.mxu0 0.0
    %804 = vmatprep.subr.mxu0 0.0
    %805 = vmatpush1.msra.mxu0 0.0
    %806 = vmatprep.subr.mxu0 0.0
    %807 = vmatpush1.msra.mxu0 0.0
    %808 = vmatprep.subr.mxu0 0.0
    %809 = vmatpush1.msra.mxu0 0.0
    %810 = vmatprep.subr.mxu0 0.0
    %811 = vmatpush1.msra.mxu0 0.0
    %812 = vmatprep.subr.mxu0 0.0
    %813 = vmatpush1.msra.mxu0 0.0
    %814 = vmatprep.subr.mxu0 0.0
    %815 = vmatpush1.msra.mxu0 0.0
    %816 = vmatprep.subr.mxu0 0.0
    %817 = vmatpush1.msra.mxu0 0.0
    %818 = vmatprep.subr.mxu0 0.0
    %819 = vmatpush1.msra.mxu0 0.0
    %820 = vmatprep.subr.mxu0 0.0
    %821 = vmatpush1.msra.mxu0 0.0
    %822 = vmatprep.subr.mxu0 0.0
    %823 = vmatpush1.msra.mxu0 0.0
    %824 = vmatprep.subr.mxu0 0.0
    %825 = vmatpush1.msra.mxu0 0.0
    %826 = vmatprep.subr.mxu0 0.0
    %827 = vmatpush1.msra.mxu0 0.0
    %828 = vmatprep.subr.mxu0 0.0
    %829 = vmatpush1.msra.mxu0 0.0
    %830 = vmatprep.subr.mxu0 0.0
    %831 = vmatpush1.msra.mxu0 0.0
    %832 = vmatprep.subr.mxu0 0.0
    %833 = vmatpush1.msra.mxu0 0.0
    %834 = vmatprep.subr.mxu0 0.0
    %835 = vmatpush1.msra.mxu0 0.0
    %836 = vmatprep.subr.mxu0 0.0
    %837 = vmatpush1.msra.mxu0 0.0
    %838 = vmatprep.subr.mxu0 0.0
    %839 = vmatpush1.msra.mxu0 0.0
    %840 = vmatprep.subr.mxu0 0.0
    %841 = vmatpush1.msra.mxu0 0.0
    %842 = vmatprep.subr.mxu0 0.0
    %843 = vmatpush1.msra.mxu0 0.0
    %844 = vmatprep.subr.mxu0 0.0
    %845 = vmatpush1.msra.mxu0 0.0
    %846 = vmatprep.subr.mxu0 0.0
    %847 = vmatpush1.msra.mxu0 0.0
    %848 = vmatprep.subr.mxu0 0.0
    %849 = vmatpush1.msra.mxu0 0.0
    %850 = vmatprep.subr.mxu0 0.0
    %851 = vmatpush1.msra.mxu0 0.0
    %852 = vmatprep.mubr.f32.mxu0 0.0
    %853 = vmatmul.mubr.f32.gmra.mrb[0].mxu0 %v786
    %v854 = vpop.f32.mrb[0].mxu0
    %v855 = vadd.f32 0.0, %v854
    %v856 = vpop.f32.mrb[0].mxu0
    %857 = vdwg.mxu0
    %v858 = vadd.f32 %v201, %v855
    %v859 = vxor.u32 %v858, 2147483648
    %v860 = vmul.f32 %v859, 1.442695
    %v861 = vpow.pop %v860
    %v862 = vadd.f32 %v861, 1.0
    %v863 = vrcp.pop %v862
    %v864 = vmul.f32 1.0, %v863
    %v865 = vtanh.pop %v858
    %867 = vrot.lane.b32.xlu0 %v784, 32
    %v868 = vpop.permute.xlu0 %867
    %v870 = vmul.f32 %v864, %v868
    %872 = vrot.lane.b32.xlu0 %v865, 64
    %v873 = vpop.permute.xlu0 %872
    %v875 = vmul.f32 %v864, %v873
    %877 = vrot.lane.b32.xlu0 %v875, 32
    %v878 = vpop.permute.xlu0 %877
    %v880 = vadd.f32 %v870, %v878
    %v881 = vtanh.pop %v880
    %883 = vrot.lane.b32.xlu0 %v881, 64
    %v884 = vpop.permute.xlu0 %883
    %v886 = vmul.f32 %v864, %v884
    %888 = vrot.lane.b32.xlu0 %v886, 32
    %v889 = vpop.permute.xlu0 %888
    %v891 = vsel %vm663, %v889, %v779
    %893 = vrot.lane.b32.xlu0 %v880, 96
    %v894 = vpop.permute.xlu0 %893
    %v896 = vsel %vm663, %v894, %v784
    %v898 = vsel %vm676, %v891, 0
    %900 = vmatprep.subr.mxu0 0.0
    %901 = vmatpush1.msra.mxu0 %v43
    %902 = vmatprep.subr.mxu0 0.0
    %903 = vmatpush1.msra.mxu0 %v44
    %904 = vmatprep.subr.mxu0 0.0
    %905 = vmatpush1.msra.mxu0 %v45
    %906 = vmatprep.subr.mxu0 0.0
    %907 = vmatpush1.msra.mxu0 %v46
    %908 = vmatprep.subr.mxu0 0.0
    %909 = vmatpush1.msra.mxu0 0.0
    %910 = vmatprep.subr.mxu0 0.0
    %911 = vmatpush1.msra.mxu0 0.0
    %912 = vmatprep.subr.mxu0 0.0
    %913 = vmatpush1.msra.mxu0 0.0
    %914 = vmatprep.subr.mxu0 0.0
    %915 = vmatpush1.msra.mxu0 0.0
    %916 = vmatprep.subr.mxu0 0.0
    %917 = vmatpush1.msra.mxu0 0.0
    %918 = vmatprep.subr.mxu0 0.0
    %919 = vmatpush1.msra.mxu0 0.0
    %920 = vmatprep.subr.mxu0 0.0
    %921 = vmatpush1.msra.mxu0 0.0
    %922 = vmatprep.subr.mxu0 0.0
    %923 = vmatpush1.msra.mxu0 0.0
    %924 = vmatprep.subr.mxu0 0.0
    %925 = vmatpush1.msra.mxu0 0.0
    %926 = vmatprep.subr.mxu0 0.0
    %927 = vmatpush1.msra.mxu0 0.0
    %928 = vmatprep.subr.mxu0 0.0
    %929 = vmatpush1.msra.mxu0 0.0
    %930 = vmatprep.subr.mxu0 0.0
    %931 = vmatpush1.msra.mxu0 0.0
    %932 = vmatprep.subr.mxu0 0.0
    %933 = vmatpush1.msra.mxu0 0.0
    %934 = vmatprep.subr.mxu0 0.0
    %935 = vmatpush1.msra.mxu0 0.0
    %936 = vmatprep.subr.mxu0 0.0
    %937 = vmatpush1.msra.mxu0 0.0
    %938 = vmatprep.subr.mxu0 0.0
    %939 = vmatpush1.msra.mxu0 0.0
    %940 = vmatprep.subr.mxu0 0.0
    %941 = vmatpush1.msra.mxu0 0.0
    %942 = vmatprep.subr.mxu0 0.0
    %943 = vmatpush1.msra.mxu0 0.0
    %944 = vmatprep.subr.mxu0 0.0
    %945 = vmatpush1.msra.mxu0 0.0
    %946 = vmatprep.subr.mxu0 0.0
    %947 = vmatpush1.msra.mxu0 0.0
    %948 = vmatprep.subr.mxu0 0.0
    %949 = vmatpush1.msra.mxu0 0.0
    %950 = vmatprep.subr.mxu0 0.0
    %951 = vmatpush1.msra.mxu0 0.0
    %952 = vmatprep.subr.mxu0 0.0
    %953 = vmatpush1.msra.mxu0 0.0
    %954 = vmatprep.subr.mxu0 0.0
    %955 = vmatpush1.msra.mxu0 0.0
    %956 = vmatprep.subr.mxu0 0.0
    %957 = vmatpush1.msra.mxu0 0.0
    %958 = vmatprep.subr.mxu0 0.0
    %959 = vmatpush1.msra.mxu0 0.0
    %960 = vmatprep.subr.mxu0 0.0
    %961 = vmatpush1.msra.mxu0 0.0
    %962 = vmatprep.subr.mxu0 0.0
    %963 = vmatpush1.msra.mxu0 0.0
    %964 = vmatprep.mubr.f32.mxu0 0.0
    %965 = vmatmul.mubr.f32.gmra.mrb[0].mxu0 %v898
    %v966 = vpop.f32.mrb[0].mxu0
    %v967 = vadd.f32 0.0, %v966
    %v968 = vpop.f32.mrb[0].mxu0
    %969 = vdwg.mxu0
    %v970 = vadd.f32 %v276, %v967
    %v971 = vxor.u32 %v970, 2147483648
    %v972 = vmul.f32 %v971, 1.442695
    %v973 = vpow.pop %v972
    %v974 = vadd.f32 %v973, 1.0
    %v975 = vrcp.pop %v974
    %v976 = vmul.f32 1.0, %v975
    %v977 = vtanh.pop %v970
    %979 = vrot.lane.b32.xlu0 %v896, 32
    %v980 = vpop.permute.xlu0 %979
    %v982 = vmul.f32 %v976, %v980
    %984 = vrot.lane.b32.xlu0 %v977, 64
    %v985 = vpop.permute.xlu0 %984
    %v987 = vmul.f32 %v976, %v985
    %989 = vrot.lane.b32.xlu0 %v987, 32
    %v990 = vpop.permute.xlu0 %989
    %v992 = vadd.f32 %v982, %v990
    %v993 = vtanh.pop %v992
    %995 = vrot.lane.b32.xlu0 %v993, 64
    %v996 = vpop.permute.xlu0 %995
    %v998 = vmul.f32 %v976, %v996
    %1000 = vrot.lane.b32.xlu0 %v998, 32
    %v1001 = vpop.permute.xlu0 %1000
    %v1003 = vsel %vm665, %v1001, %v891
    %1005 = vrot.lane.b32.xlu0 %v992, 96
    %v1006 = vpop.permute.xlu0 %1005
    %v1008 = vsel %vm665, %v1006, %v896
    %v1010 = vsel %vm676, %v1003, 0
    %1012 = vmatprep.subr.mxu0 0.0
    %1013 = vmatpush1.msra.mxu0 %v43
    %1014 = vmatprep.subr.mxu0 0.0
    %1015 = vmatpush1.msra.mxu0 %v44
    %1016 = vmatprep.subr.mxu0 0.0
    %1017 = vmatpush1.msra.mxu0 %v45
    %1018 = vmatprep.subr.mxu0 0.0
    %1019 = vmatpush1.msra.mxu0 %v46
    %1020 = vmatprep.subr.mxu0 0.0
    %1021 = vmatpush1.msra.mxu0 0.0
    %1022 = vmatprep.subr.mxu0 0.0
    %1023 = vmatpush1.msra.mxu0 0.0
    %1024 = vmatprep.subr.mxu0 0.0
    %1025 = vmatpush1.msra.mxu0 0.0
    %1026 = vmatprep.subr.mxu0 0.0
    %1027 = vmatpush1.msra.mxu0 0.0
    %1028 = vmatprep.subr.mxu0 0.0
    %1029 = vmatpush1.msra.mxu0 0.0
    %1030 = vmatprep.subr.mxu0 0.0
    %1031 = vmatpush1.msra.mxu0 0.0
    %1032 = vmatprep.subr.mxu0 0.0
    %1033 = vmatpush1.msra.mxu0 0.0
    %1034 = vmatprep.subr.mxu0 0.0
    %1035 = vmatpush1.msra.mxu0 0.0
    %1036 = vmatprep.subr.mxu0 0.0
    %1037 = vmatpush1.msra.mxu0 0.0
    %1038 = vmatprep.subr.mxu0 0.0
    %1039 = vmatpush1.msra.mxu0 0.0
    %1040 = vmatprep.subr.mxu0 0.0
    %1041 = vmatpush1.msra.mxu0 0.0
    %1042 = vmatprep.subr.mxu0 0.0
    %1043 = vmatpush1.msra.mxu0 0.0
    %1044 = vmatprep.subr.mxu0 0.0
    %1045 = vmatpush1.msra.mxu0 0.0
    %1046 = vmatprep.subr.mxu0 0.0
    %1047 = vmatpush1.msra.mxu0 0.0
    %1048 = vmatprep.subr.mxu0 0.0
    %1049 = vmatpush1.msra.mxu0 0.0
    %1050 = vmatprep.subr.mxu0 0.0
    %1051 = vmatpush1.msra.mxu0 0.0
    %1052 = vmatprep.subr.mxu0 0.0
    %1053 = vmatpush1.msra.mxu0 0.0
    %1054 = vmatprep.subr.mxu0 0.0
    %1055 = vmatpush1.msra.mxu0 0.0
    %1056 = vmatprep.subr.mxu0 0.0
    %1057 = vmatpush1.msra.mxu0 0.0
    %1058 = vmatprep.subr.mxu0 0.0
    %1059 = vmatpush1.msra.mxu0 0.0
    %1060 = vmatprep.subr.mxu0 0.0
    %1061 = vmatpush1.msra.mxu0 0.0
    %1062 = vmatprep.subr.mxu0 0.0
    %1063 = vmatpush1.msra.mxu0 0.0
    %1064 = vmatprep.subr.mxu0 0.0
    %1065 = vmatpush1.msra.mxu0 0.0
    %1066 = vmatprep.subr.mxu0 0.0
    %1067 = vmatpush1.msra.mxu0 0.0
    %1068 = vmatprep.subr.mxu0 0.0
    %1069 = vmatpush1.msra.mxu0 0.0
    %1070 = vmatprep.subr.mxu0 0.0
    %1071 = vmatpush1.msra.mxu0 0.0
    %1072 = vmatprep.subr.mxu0 0.0
    %1073 = vmatpush1.msra.mxu0 0.0
    %1074 = vmatprep.subr.mxu0 0.0
    %1075 = vmatpush1.msra.mxu0 0.0
    %1076 = vmatprep.mubr.f32.mxu0 0.0
    %1077 = vmatmul.mubr.f32.gmra.mrb[0].mxu0 %v1010
    %v1078 = vpop.f32.mrb[0].mxu0
    %v1079 = vadd.f32 0.0, %v1078
    %v1080 = vpop.f32.mrb[0].mxu0
    %1081 = vdwg.mxu0
    %v1082 = vadd.f32 %v351, %v1079
    %v1083 = vxor.u32 %v1082, 2147483648
    %v1084 = vmul.f32 %v1083, 1.442695
    %v1085 = vpow.pop %v1084
    %v1086 = vadd.f32 %v1085, 1.0
    %v1087 = vrcp.pop %v1086
    %v1088 = vmul.f32 1.0, %v1087
    %v1089 = vtanh.pop %v1082
    %1091 = vrot.lane.b32.xlu0 %v1008, 32
    %v1092 = vpop.permute.xlu0 %1091
    %v1094 = vmul.f32 %v1088, %v1092
    %1096 = vrot.lane.b32.xlu0 %v1089, 64
    %v1097 = vpop.permute.xlu0 %1096
    %v1099 = vmul.f32 %v1088, %v1097
    %1101 = vrot.lane.b32.xlu0 %v1099, 32
    %v1102 = vpop.permute.xlu0 %1101
    %v1104 = vadd.f32 %v1094, %v1102
    %v1105 = vtanh.pop %v1104
    %1107 = vrot.lane.b32.xlu0 %v1105, 64
    %v1108 = vpop.permute.xlu0 %1107
    %v1110 = vmul.f32 %v1088, %v1108
    %1112 = vrot.lane.b32.xlu0 %v1110, 32
    %v1113 = vpop.permute.xlu0 %1112
    %v1115 = vsel %vm667, %v1113, %v1003
    %1117 = vrot.lane.b32.xlu0 %v1104, 96
    %v1118 = vpop.permute.xlu0 %1117
    %v1120 = vsel %vm667, %v1118, %v1008
    %v1122 = vsel %vm676, %v1115, 0
    %1124 = vmatprep.subr.mxu0 0.0
    %1125 = vmatpush1.msra.mxu0 %v43
    %1126 = vmatprep.subr.mxu0 0.0
    %1127 = vmatpush1.msra.mxu0 %v44
    %1128 = vmatprep.subr.mxu0 0.0
    %1129 = vmatpush1.msra.mxu0 %v45
    %1130 = vmatprep.subr.mxu0 0.0
    %1131 = vmatpush1.msra.mxu0 %v46
    %1132 = vmatprep.subr.mxu0 0.0
    %1133 = vmatpush1.msra.mxu0 0.0
    %1134 = vmatprep.subr.mxu0 0.0
    %1135 = vmatpush1.msra.mxu0 0.0
    %1136 = vmatprep.subr.mxu0 0.0
    %1137 = vmatpush1.msra.mxu0 0.0
    %1138 = vmatprep.subr.mxu0 0.0
    %1139 = vmatpush1.msra.mxu0 0.0
    %1140 = vmatprep.subr.mxu0 0.0
    %1141 = vmatpush1.msra.mxu0 0.0
    %1142 = vmatprep.subr.mxu0 0.0
    %1143 = vmatpush1.msra.mxu0 0.0
    %1144 = vmatprep.subr.mxu0 0.0
    %1145 = vmatpush1.msra.mxu0 0.0
    %1146 = vmatprep.subr.mxu0 0.0
    %1147 = vmatpush1.msra.mxu0 0.0
    %1148 = vmatprep.subr.mxu0 0.0
    %1149 = vmatpush1.msra.mxu0 0.0
    %1150 = vmatprep.subr.mxu0 0.0
    %1151 = vmatpush1.msra.mxu0 0.0
    %1152 = vmatprep.subr.mxu0 0.0
    %1153 = vmatpush1.msra.mxu0 0.0
    %1154 = vmatprep.subr.mxu0 0.0
    %1155 = vmatpush1.msra.mxu0 0.0
    %1156 = vmatprep.subr.mxu0 0.0
    %1157 = vmatpush1.msra.mxu0 0.0
    %1158 = vmatprep.subr.mxu0 0.0
    %1159 = vmatpush1.msra.mxu0 0.0
    %1160 = vmatprep.subr.mxu0 0.0
    %1161 = vmatpush1.msra.mxu0 0.0
    %1162 = vmatprep.subr.mxu0 0.0
    %1163 = vmatpush1.msra.mxu0 0.0
    %1164 = vmatprep.subr.mxu0 0.0
    %1165 = vmatpush1.msra.mxu0 0.0
    %1166 = vmatprep.subr.mxu0 0.0
    %1167 = vmatpush1.msra.mxu0 0.0
    %1168 = vmatprep.subr.mxu0 0.0
    %1169 = vmatpush1.msra.mxu0 0.0
    %1170 = vmatprep.subr.mxu0 0.0
    %1171 = vmatpush1.msra.mxu0 0.0
    %1172 = vmatprep.subr.mxu0 0.0
    %1173 = vmatpush1.msra.mxu0 0.0
    %1174 = vmatprep.subr.mxu0 0.0
    %1175 = vmatpush1.msra.mxu0 0.0
    %1176 = vmatprep.subr.mxu0 0.0
    %1177 = vmatpush1.msra.mxu0 0.0
    %1178 = vmatprep.subr.mxu0 0.0
    %1179 = vmatpush1.msra.mxu0 0.0
    %1180 = vmatprep.subr.mxu0 0.0
    %1181 = vmatpush1.msra.mxu0 0.0
    %1182 = vmatprep.subr.mxu0 0.0
    %1183 = vmatpush1.msra.mxu0 0.0
    %1184 = vmatprep.subr.mxu0 0.0
    %1185 = vmatpush1.msra.mxu0 0.0
    %1186 = vmatprep.subr.mxu0 0.0
    %1187 = vmatpush1.msra.mxu0 0.0
    %1188 = vmatprep.mubr.f32.mxu0 0.0
    %1189 = vmatmul.mubr.f32.gmra.mrb[0].mxu0 %v1122
    %v1190 = vpop.f32.mrb[0].mxu0
    %v1191 = vadd.f32 0.0, %v1190
    %v1192 = vpop.f32.mrb[0].mxu0
    %1193 = vdwg.mxu0
    %v1194 = vadd.f32 %v426, %v1191
    %v1195 = vxor.u32 %v1194, 2147483648
    %v1196 = vmul.f32 %v1195, 1.442695
    %v1197 = vpow.pop %v1196
    %v1198 = vadd.f32 %v1197, 1.0
    %v1199 = vrcp.pop %v1198
    %v1200 = vmul.f32 1.0, %v1199
    %v1201 = vtanh.pop %v1194
    %1203 = vrot.lane.b32.xlu0 %v1120, 32
    %v1204 = vpop.permute.xlu0 %1203
    %v1206 = vmul.f32 %v1200, %v1204
    %1208 = vrot.lane.b32.xlu0 %v1201, 64
    %v1209 = vpop.permute.xlu0 %1208
    %v1211 = vmul.f32 %v1200, %v1209
    %1213 = vrot.lane.b32.xlu0 %v1211, 32
    %v1214 = vpop.permute.xlu0 %1213
    %v1216 = vadd.f32 %v1206, %v1214
    %v1217 = vtanh.pop %v1216
    %1219 = vrot.lane.b32.xlu0 %v1217, 64
    %v1220 = vpop.permute.xlu0 %1219
    %v1222 = vmul.f32 %v1200, %v1220
    %1224 = vrot.lane.b32.xlu0 %v1222, 32
    %v1225 = vpop.permute.xlu0 %1224
    %v1227 = vsel %vm669, %v1225, %v1115
    %1229 = vrot.lane.b32.xlu0 %v1216, 96
    %v1230 = vpop.permute.xlu0 %1229
    %v1232 = vsel %vm669, %v1230, %v1120
    %v1234 = vsel %vm676, %v1227, 0
    %1236 = vmatprep.subr.mxu0 0.0
    %1237 = vmatpush1.msra.mxu0 %v43
    %1238 = vmatprep.subr.mxu0 0.0
    %1239 = vmatpush1.msra.mxu0 %v44
    %1240 = vmatprep.subr.mxu0 0.0
    %1241 = vmatpush1.msra.mxu0 %v45
    %1242 = vmatprep.subr.mxu0 0.0
    %1243 = vmatpush1.msra.mxu0 %v46
    %1244 = vmatprep.subr.mxu0 0.0
    %1245 = vmatpush1.msra.mxu0 0.0
    %1246 = vmatprep.subr.mxu0 0.0
    %1247 = vmatpush1.msra.mxu0 0.0
    %1248 = vmatprep.subr.mxu0 0.0
    %1249 = vmatpush1.msra.mxu0 0.0
    %1250 = vmatprep.subr.mxu0 0.0
    %1251 = vmatpush1.msra.mxu0 0.0
    %1252 = vmatprep.subr.mxu0 0.0
    %1253 = vmatpush1.msra.mxu0 0.0
    %1254 = vmatprep.subr.mxu0 0.0
    %1255 = vmatpush1.msra.mxu0 0.0
    %1256 = vmatprep.subr.mxu0 0.0
    %1257 = vmatpush1.msra.mxu0 0.0
    %1258 = vmatprep.subr.mxu0 0.0
    %1259 = vmatpush1.msra.mxu0 0.0
    %1260 = vmatprep.subr.mxu0 0.0
    %1261 = vmatpush1.msra.mxu0 0.0
    %1262 = vmatprep.subr.mxu0 0.0
    %1263 = vmatpush1.msra.mxu0 0.0
    %1264 = vmatprep.subr.mxu0 0.0
    %1265 = vmatpush1.msra.mxu0 0.0
    %1266 = vmatprep.subr.mxu0 0.0
    %1267 = vmatpush1.msra.mxu0 0.0
    %1268 = vmatprep.subr.mxu0 0.0
    %1269 = vmatpush1.msra.mxu0 0.0
    %1270 = vmatprep.subr.mxu0 0.0
    %1271 = vmatpush1.msra.mxu0 0.0
    %1272 = vmatprep.subr.mxu0 0.0
    %1273 = vmatpush1.msra.mxu0 0.0
    %1274 = vmatprep.subr.mxu0 0.0
    %1275 = vmatpush1.msra.mxu0 0.0
    %1276 = vmatprep.subr.mxu0 0.0
    %1277 = vmatpush1.msra.mxu0 0.0
    %1278 = vmatprep.subr.mxu0 0.0
    %1279 = vmatpush1.msra.mxu0 0.0
    %1280 = vmatprep.subr.mxu0 0.0
    %1281 = vmatpush1.msra.mxu0 0.0
    %1282 = vmatprep.subr.mxu0 0.0
    %1283 = vmatpush1.msra.mxu0 0.0
    %1284 = vmatprep.subr.mxu0 0.0
    %1285 = vmatpush1.msra.mxu0 0.0
    %1286 = vmatprep.subr.mxu0 0.0
    %1287 = vmatpush1.msra.mxu0 0.0
    %1288 = vmatprep.subr.mxu0 0.0
    %1289 = vmatpush1.msra.mxu0 0.0
    %1290 = vmatprep.subr.mxu0 0.0
    %1291 = vmatpush1.msra.mxu0 0.0
    %1292 = vmatprep.subr.mxu0 0.0
    %1293 = vmatpush1.msra.mxu0 0.0
    %1294 = vmatprep.subr.mxu0 0.0
    %1295 = vmatpush1.msra.mxu0 0.0
    %1296 = vmatprep.subr.mxu0 0.0
    %1297 = vmatpush1.msra.mxu0 0.0
    %1298 = vmatprep.subr.mxu0 0.0
    %1299 = vmatpush1.msra.mxu0 0.0
    %1300 = vmatprep.mubr.f32.mxu0 0.0
    %1301 = vmatmul.mubr.f32.gmra.mrb[0].mxu0 %v1234
    %v1302 = vpop.f32.mrb[0].mxu0
    %v1303 = vadd.f32 0.0, %v1302
    %v1304 = vpop.f32.mrb[0].mxu0
    %1305 = vdwg.mxu0
    %v1306 = vadd.f32 %v501, %v1303
    %v1307 = vxor.u32 %v1306, 2147483648
    %v1308 = vmul.f32 %v1307, 1.442695
    %v1309 = vpow.pop %v1308
    %v1310 = vadd.f32 %v1309, 1.0
    %v1311 = vrcp.pop %v1310
    %v1312 = vmul.f32 1.0, %v1311
    %v1313 = vtanh.pop %v1306
    %1315 = vrot.lane.b32.xlu0 %v1232, 32
    %v1316 = vpop.permute.xlu0 %1315
    %v1318 = vmul.f32 %v1312, %v1316
    %1320 = vrot.lane.b32.xlu0 %v1313, 64
    %v1321 = vpop.permute.xlu0 %1320
    %v1323 = vmul.f32 %v1312, %v1321
    %1325 = vrot.lane.b32.xlu0 %v1323, 32
    %v1326 = vpop.permute.xlu0 %1325
    %v1328 = vadd.f32 %v1318, %v1326
    %v1329 = vtanh.pop %v1328
    %1331 = vrot.lane.b32.xlu0 %v1329, 64
    %v1332 = vpop.permute.xlu0 %1331
    %v1334 = vmul.f32 %v1312, %v1332
    %1336 = vrot.lane.b32.xlu0 %v1334, 32
    %v1337 = vpop.permute.xlu0 %1336
    %v1339 = vsel %vm671, %v1337, %v1227
    %1341 = vrot.lane.b32.xlu0 %v1328, 96
    %v1342 = vpop.permute.xlu0 %1341
    %v1344 = vsel %vm671, %v1342, %v1232
    %v1346 = vsel %vm676, %v1339, 0
    %1348 = vmatprep.subr.mxu0 0.0
    %1349 = vmatpush1.msra.mxu0 %v43
    %1350 = vmatprep.subr.mxu0 0.0
    %1351 = vmatpush1.msra.mxu0 %v44
    %1352 = vmatprep.subr.mxu0 0.0
    %1353 = vmatpush1.msra.mxu0 %v45
    %1354 = vmatprep.subr.mxu0 0.0
    %1355 = vmatpush1.msra.mxu0 %v46
    %1356 = vmatprep.subr.mxu0 0.0
    %1357 = vmatpush1.msra.mxu0 0.0
    %1358 = vmatprep.subr.mxu0 0.0
    %1359 = vmatpush1.msra.mxu0 0.0
    %1360 = vmatprep.subr.mxu0 0.0
    %1361 = vmatpush1.msra.mxu0 0.0
    %1362 = vmatprep.subr.mxu0 0.0
    %1363 = vmatpush1.msra.mxu0 0.0
    %1364 = vmatprep.subr.mxu0 0.0
    %1365 = vmatpush1.msra.mxu0 0.0
    %1366 = vmatprep.subr.mxu0 0.0
    %1367 = vmatpush1.msra.mxu0 0.0
    %1368 = vmatprep.subr.mxu0 0.0
    %1369 = vmatpush1.msra.mxu0 0.0
    %1370 = vmatprep.subr.mxu0 0.0
    %1371 = vmatpush1.msra.mxu0 0.0
    %1372 = vmatprep.subr.mxu0 0.0
    %1373 = vmatpush1.msra.mxu0 0.0
    %1374 = vmatprep.subr.mxu0 0.0
    %1375 = vmatpush1.msra.mxu0 0.0
    %1376 = vmatprep.subr.mxu0 0.0
    %1377 = vmatpush1.msra.mxu0 0.0
    %1378 = vmatprep.subr.mxu0 0.0
    %1379 = vmatpush1.msra.mxu0 0.0
    %1380 = vmatprep.subr.mxu0 0.0
    %1381 = vmatpush1.msra.mxu0 0.0
    %1382 = vmatprep.subr.mxu0 0.0
    %1383 = vmatpush1.msra.mxu0 0.0
    %1384 = vmatprep.subr.mxu0 0.0
    %1385 = vmatpush1.msra.mxu0 0.0
    %1386 = vmatprep.subr.mxu0 0.0
    %1387 = vmatpush1.msra.mxu0 0.0
    %1388 = vmatprep.subr.mxu0 0.0
    %1389 = vmatpush1.msra.mxu0 0.0
    %1390 = vmatprep.subr.mxu0 0.0
    %1391 = vmatpush1.msra.mxu0 0.0
    %1392 = vmatprep.subr.mxu0 0.0
    %1393 = vmatpush1.msra.mxu0 0.0
    %1394 = vmatprep.subr.mxu0 0.0
    %1395 = vmatpush1.msra.mxu0 0.0
    %1396 = vmatprep.subr.mxu0 0.0
    %1397 = vmatpush1.msra.mxu0 0.0
    %1398 = vmatprep.subr.mxu0 0.0
    %1399 = vmatpush1.msra.mxu0 0.0
    %1400 = vmatprep.subr.mxu0 0.0
    %1401 = vmatpush1.msra.mxu0 0.0
    %1402 = vmatprep.subr.mxu0 0.0
    %1403 = vmatpush1.msra.mxu0 0.0
    %1404 = vmatprep.subr.mxu0 0.0
    %1405 = vmatpush1.msra.mxu0 0.0
    %1406 = vmatprep.subr.mxu0 0.0
    %1407 = vmatpush1.msra.mxu0 0.0
    %1408 = vmatprep.subr.mxu0 0.0
    %1409 = vmatpush1.msra.mxu0 0.0
    %1410 = vmatprep.subr.mxu0 0.0
    %1411 = vmatpush1.msra.mxu0 0.0
    %1412 = vmatprep.mubr.f32.mxu0 0.0
    %1413 = vmatmul.mubr.f32.gmra.mrb[0].mxu0 %v1346
    %v1414 = vpop.f32.mrb[0].mxu0
    %v1415 = vadd.f32 0.0, %v1414
    %v1416 = vpop.f32.mrb[0].mxu0
    %1417 = vdwg.mxu0
    %v1418 = vadd.f32 %v576, %v1415
    %v1419 = vxor.u32 %v1418, 2147483648
    %v1420 = vmul.f32 %v1419, 1.442695
    %v1421 = vpow.pop %v1420
    %v1422 = vadd.f32 %v1421, 1.0
    %v1423 = vrcp.pop %v1422
    %v1424 = vmul.f32 1.0, %v1423
    %v1425 = vtanh.pop %v1418
    %1427 = vrot.lane.b32.xlu0 %v1344, 32
    %v1428 = vpop.permute.xlu0 %1427
    %v1430 = vmul.f32 %v1424, %v1428
    %1432 = vrot.lane.b32.xlu0 %v1425, 64
    %v1433 = vpop.permute.xlu0 %1432
    %v1435 = vmul.f32 %v1424, %v1433
    %1437 = vrot.lane.b32.xlu0 %v1435, 32
    %v1438 = vpop.permute.xlu0 %1437
    %v1440 = vadd.f32 %v1430, %v1438
    %v1441 = vtanh.pop %v1440
    %1443 = vrot.lane.b32.xlu0 %v1441, 64
    %v1444 = vpop.permute.xlu0 %1443
    %v1446 = vmul.f32 %v1424, %v1444
    %1448 = vrot.lane.b32.xlu0 %v1446, 32
    %v1449 = vpop.permute.xlu0 %1448
    %v1451 = vsel %vm673, %v1449, %v1339
    %1453 = vrot.lane.b32.xlu0 %v1440, 96
    %v1454 = vpop.permute.xlu0 %1453
    %v1456 = vsel %vm673, %v1454, %v1344
    %v1458 = vsel %vm676, %v1451, 0
    %1460 = vmatprep.subr.mxu0 0.0
    %1461 = vmatpush1.msra.mxu0 %v43
    %1462 = vmatprep.subr.mxu0 0.0
    %1463 = vmatpush1.msra.mxu0 %v44
    %1464 = vmatprep.subr.mxu0 0.0
    %1465 = vmatpush1.msra.mxu0 %v45
    %1466 = vmatprep.subr.mxu0 0.0
    %1467 = vmatpush1.msra.mxu0 %v46
    %1468 = vmatprep.subr.mxu0 0.0
    %1469 = vmatpush1.msra.mxu0 0.0
    %1470 = vmatprep.subr.mxu0 0.0
    %1471 = vmatpush1.msra.mxu0 0.0
    %1472 = vmatprep.subr.mxu0 0.0
    %1473 = vmatpush1.msra.mxu0 0.0
    %1474 = vmatprep.subr.mxu0 0.0
    %1475 = vmatpush1.msra.mxu0 0.0
    %1476 = vmatprep.subr.mxu0 0.0
    %1477 = vmatpush1.msra.mxu0 0.0
    %1478 = vmatprep.subr.mxu0 0.0
    %1479 = vmatpush1.msra.mxu0 0.0
    %1480 = vmatprep.subr.mxu0 0.0
    %1481 = vmatpush1.msra.mxu0 0.0
    %1482 = vmatprep.subr.mxu0 0.0
    %1483 = vmatpush1.msra.mxu0 0.0
    %1484 = vmatprep.subr.mxu0 0.0
    %1485 = vmatpush1.msra.mxu0 0.0
    %1486 = vmatprep.subr.mxu0 0.0
    %1487 = vmatpush1.msra.mxu0 0.0
    %1488 = vmatprep.subr.mxu0 0.0
    %1489 = vmatpush1.msra.mxu0 0.0
    %1490 = vmatprep.subr.mxu0 0.0
    %1491 = vmatpush1.msra.mxu0 0.0
    %1492 = vmatprep.subr.mxu0 0.0
    %1493 = vmatpush1.msra.mxu0 0.0
    %1494 = vmatprep.subr.mxu0 0.0
    %1495 = vmatpush1.msra.mxu0 0.0
    %1496 = vmatprep.subr.mxu0 0.0
    %1497 = vmatpush1.msra.mxu0 0.0
    %1498 = vmatprep.subr.mxu0 0.0
    %1499 = vmatpush1.msra.mxu0 0.0
    %1500 = vmatprep.subr.mxu0 0.0
    %1501 = vmatpush1.msra.mxu0 0.0
    %1502 = vmatprep.subr.mxu0 0.0
    %1503 = vmatpush1.msra.mxu0 0.0
    %1504 = vmatprep.subr.mxu0 0.0
    %1505 = vmatpush1.msra.mxu0 0.0
    %1506 = vmatprep.subr.mxu0 0.0
    %1507 = vmatpush1.msra.mxu0 0.0
    %1508 = vmatprep.subr.mxu0 0.0
    %1509 = vmatpush1.msra.mxu0 0.0
    %1510 = vmatprep.subr.mxu0 0.0
    %1511 = vmatpush1.msra.mxu0 0.0
    %1512 = vmatprep.subr.mxu0 0.0
    %1513 = vmatpush1.msra.mxu0 0.0
    %1514 = vmatprep.subr.mxu0 0.0
    %1515 = vmatpush1.msra.mxu0 0.0
    %1516 = vmatprep.subr.mxu0 0.0
    %1517 = vmatpush1.msra.mxu0 0.0
    %1518 = vmatprep.subr.mxu0 0.0
    %1519 = vmatpush1.msra.mxu0 0.0
    %1520 = vmatprep.subr.mxu0 0.0
    %1521 = vmatpush1.msra.mxu0 0.0
    %1522 = vmatprep.subr.mxu0 0.0
    %1523 = vmatpush1.msra.mxu0 0.0
    %1524 = vmatprep.mubr.f32.mxu0 0.0
    %1525 = vmatmul.mubr.f32.gmra.mrb[0].mxu0 %v1458
    %v1526 = vpop.f32.mrb[0].mxu0
    %v1527 = vadd.f32 0.0, %v1526
    %v1528 = vpop.f32.mrb[0].mxu0
    %1529 = vdwg.mxu0
    %v1530 = vadd.f32 %v651, %v1527
    %v1531 = vxor.u32 %v1530, 2147483648
    %v1532 = vmul.f32 %v1531, 1.442695
    %v1533 = vpow.pop %v1532
    %v1534 = vadd.f32 %v1533, 1.0
    %v1535 = vrcp.pop %v1534
    %v1536 = vmul.f32 1.0, %v1535
    %v1537 = vtanh.pop %v1530
    %1539 = vrot.lane.b32.xlu0 %v1456, 32
    %v1540 = vpop.permute.xlu0 %1539
    %v1542 = vmul.f32 %v1536, %v1540
    %1544 = vrot.lane.b32.xlu0 %v1537, 64
    %v1545 = vpop.permute.xlu0 %1544
    %v1547 = vmul.f32 %v1536, %v1545
    %1549 = vrot.lane.b32.xlu0 %v1547, 32
    %v1550 = vpop.permute.xlu0 %1549
    %v1552 = vadd.f32 %v1542, %v1550
    %v1553 = vtanh.pop %v1552
    %1555 = vrot.lane.b32.xlu0 %v1553, 64
    %v1556 = vpop.permute.xlu0 %1555
    %v1558 = vmul.f32 %v1536, %v1556
    %1560 = vrot.lane.b32.xlu0 %v1558, 32
    %v1561 = vpop.permute.xlu0 %1560
    %v1563 = vsel %vm675, %v1561, %v1451
    %v1564 = vld [vmem:[%s6] sm:$0xff]
    %v1565 = vld [vmem:[%s6 + $0x8] sm:$0xff]
    %v1566 = vld [vmem:[%s6 + $0x10] sm:$0xff]
    %v1567 = vld [vmem:[%s6 + $0x18] sm:$0xff]
    %v1568 = vld [vmem:[%s7] sm:$0x1]
    %v1570 = vlaneseq
    %v1571 = vshrl.u32 %v1570, 7
    %v1572 = vsub.s32 0, %v1571
    %v1573 = vrot.slane %v1568, %v1572
    %v1576 = vsel %vm676, %v1563, 0
    %1578 = vmatprep.subr.mxu0 0.0
    %1579 = vmatpush1.msra.mxu0 %v1564
    %1580 = vmatprep.subr.mxu0 0.0
    %1581 = vmatpush1.msra.mxu0 %v1565
    %1582 = vmatprep.subr.mxu0 0.0
    %1583 = vmatpush1.msra.mxu0 %v1566
    %1584 = vmatprep.subr.mxu0 0.0
    %1585 = vmatpush1.msra.mxu0 %v1567
    %1586 = vmatprep.subr.mxu0 0.0
    %1587 = vmatpush1.msra.mxu0 0.0
    %1588 = vmatprep.subr.mxu0 0.0
    %1589 = vmatpush1.msra.mxu0 0.0
    %1590 = vmatprep.subr.mxu0 0.0
    %1591 = vmatpush1.msra.mxu0 0.0
    %1592 = vmatprep.subr.mxu0 0.0
    %1593 = vmatpush1.msra.mxu0 0.0
    %1594 = vmatprep.subr.mxu0 0.0
    %1595 = vmatpush1.msra.mxu0 0.0
    %1596 = vmatprep.subr.mxu0 0.0
    %1597 = vmatpush1.msra.mxu0 0.0
    %1598 = vmatprep.subr.mxu0 0.0
    %1599 = vmatpush1.msra.mxu0 0.0
    %1600 = vmatprep.subr.mxu0 0.0
    %1601 = vmatpush1.msra.mxu0 0.0
    %1602 = vmatprep.subr.mxu0 0.0
    %1603 = vmatpush1.msra.mxu0 0.0
    %1604 = vmatprep.subr.mxu0 0.0
    %1605 = vmatpush1.msra.mxu0 0.0
    %1606 = vmatprep.subr.mxu0 0.0
    %1607 = vmatpush1.msra.mxu0 0.0
    %1608 = vmatprep.subr.mxu0 0.0
    %1609 = vmatpush1.msra.mxu0 0.0
    %1610 = vmatprep.subr.mxu0 0.0
    %1611 = vmatpush1.msra.mxu0 0.0
    %1612 = vmatprep.subr.mxu0 0.0
    %1613 = vmatpush1.msra.mxu0 0.0
    %1614 = vmatprep.subr.mxu0 0.0
    %1615 = vmatpush1.msra.mxu0 0.0
    %1616 = vmatprep.subr.mxu0 0.0
    %1617 = vmatpush1.msra.mxu0 0.0
    %1618 = vmatprep.subr.mxu0 0.0
    %1619 = vmatpush1.msra.mxu0 0.0
    %1620 = vmatprep.subr.mxu0 0.0
    %1621 = vmatpush1.msra.mxu0 0.0
    %1622 = vmatprep.subr.mxu0 0.0
    %1623 = vmatpush1.msra.mxu0 0.0
    %1624 = vmatprep.subr.mxu0 0.0
    %1625 = vmatpush1.msra.mxu0 0.0
    %1626 = vmatprep.subr.mxu0 0.0
    %1627 = vmatpush1.msra.mxu0 0.0
    %1628 = vmatprep.subr.mxu0 0.0
    %1629 = vmatpush1.msra.mxu0 0.0
    %1630 = vmatprep.subr.mxu0 0.0
    %1631 = vmatpush1.msra.mxu0 0.0
    %1632 = vmatprep.subr.mxu0 0.0
    %1633 = vmatpush1.msra.mxu0 0.0
    %1634 = vmatprep.subr.mxu0 0.0
    %1635 = vmatpush1.msra.mxu0 0.0
    %1636 = vmatprep.subr.mxu0 0.0
    %1637 = vmatpush1.msra.mxu0 0.0
    %1638 = vmatprep.subr.mxu0 0.0
    %1639 = vmatpush1.msra.mxu0 0.0
    %1640 = vmatprep.subr.mxu0 0.0
    %1641 = vmatpush1.msra.mxu0 0.0
    %1642 = vmatprep.mubr.f32.mxu0 0.0
    %1643 = vmatmul.mubr.f32.gmra.mrb[0].mxu0 %v1576
    %v1644 = vpop.f32.mrb[0].mxu0
    %v1645 = vadd.f32 %v1573, %v1644
    %v1646 = vpop.f32.mrb[0].mxu0
    %1647 = vdwg.mxu0
    %v1648 = vmax.f32 %v1645, 0.0
    %v1649 = vld [vmem:[%s8] sm:$0xff]
    %v1650 = vld [vmem:[%s8 + $0x8] sm:$0xff]
    %v1651 = vld [vmem:[%s8 + $0x10] sm:$0xff]
    %v1652 = vld [vmem:[%s8 + $0x18] sm:$0xff]
    %v1653 = vld [vmem:[#allocation2] sm:$0x1]
    %v1655 = vlaneseq
    %v1656 = vshrl.u32 %v1655, 7
    %v1657 = vsub.s32 0, %v1656
    %v1658 = vrot.slane %v1653, %v1657
    %v1661 = vsel %vm676, %v1648, 0
    %1663 = vmatprep.subr.mxu0 0.0
    %1664 = vmatpush1.msra.mxu0 %v1649
    %1665 = vmatprep.subr.mxu0 0.0
    %1666 = vmatpush1.msra.mxu0 %v1650
    %1667 = vmatprep.subr.mxu0 0.0
    %1668 = vmatpush1.msra.mxu0 %v1651
    %1669 = vmatprep.subr.mxu0 0.0
    %1670 = vmatpush1.msra.mxu0 %v1652
    %1671 = vmatprep.subr.mxu0 0.0
    %1672 = vmatpush1.msra.mxu0 0.0
    %1673 = vmatprep.subr.mxu0 0.0
    %1674 = vmatpush1.msra.mxu0 0.0
    %1675 = vmatprep.subr.mxu0 0.0
    %1676 = vmatpush1.msra.mxu0 0.0
    %1677 = vmatprep.subr.mxu0 0.0
    %1678 = vmatpush1.msra.mxu0 0.0
    %1679 = vmatprep.subr.mxu0 0.0
    %1680 = vmatpush1.msra.mxu0 0.0
    %1681 = vmatprep.subr.mxu0 0.0
    %1682 = vmatpush1.msra.mxu0 0.0
    %1683 = vmatprep.subr.mxu0 0.0
    %1684 = vmatpush1.msra.mxu0 0.0
    %1685 = vmatprep.subr.mxu0 0.0
    %1686 = vmatpush1.msra.mxu0 0.0
    %1687 = vmatprep.subr.mxu0 0.0
    %1688 = vmatpush1.msra.mxu0 0.0
    %1689 = vmatprep.subr.mxu0 0.0
    %1690 = vmatpush1.msra.mxu0 0.0
    %1691 = vmatprep.subr.mxu0 0.0
    %1692 = vmatpush1.msra.mxu0 0.0
    %1693 = vmatprep.subr.mxu0 0.0
    %1694 = vmatpush1.msra.mxu0 0.0
    %1695 = vmatprep.subr.mxu0 0.0
    %1696 = vmatpush1.msra.mxu0 0.0
    %1697 = vmatprep.subr.mxu0 0.0
    %1698 = vmatpush1.msra.mxu0 0.0
    %1699 = vmatprep.subr.mxu0 0.0
    %1700 = vmatpush1.msra.mxu0 0.0
    %1701 = vmatprep.subr.mxu0 0.0
    %1702 = vmatpush1.msra.mxu0 0.0
    %1703 = vmatprep.subr.mxu0 0.0
    %1704 = vmatpush1.msra.mxu0 0.0
    %1705 = vmatprep.subr.mxu0 0.0
    %1706 = vmatpush1.msra.mxu0 0.0
    %1707 = vmatprep.subr.mxu0 0.0
    %1708 = vmatpush1.msra.mxu0 0.0
    %1709 = vmatprep.subr.mxu0 0.0
    %1710 = vmatpush1.msra.mxu0 0.0
    %1711 = vmatprep.subr.mxu0 0.0
    %1712 = vmatpush1.msra.mxu0 0.0
    %1713 = vmatprep.subr.mxu0 0.0
    %1714 = vmatpush1.msra.mxu0 0.0
    %1715 = vmatprep.subr.mxu0 0.0
    %1716 = vmatpush1.msra.mxu0 0.0
    %1717 = vmatprep.subr.mxu0 0.0
    %1718 = vmatpush1.msra.mxu0 0.0
    %1719 = vmatprep.subr.mxu0 0.0
    %1720 = vmatpush1.msra.mxu0 0.0
    %1721 = vmatprep.subr.mxu0 0.0
    %1722 = vmatpush1.msra.mxu0 0.0
    %1723 = vmatprep.subr.mxu0 0.0
    %1724 = vmatpush1.msra.mxu0 0.0
    %1725 = vmatprep.subr.mxu0 0.0
    %1726 = vmatpush1.msra.mxu0 0.0
    %1727 = vmatprep.mubr.f32.mxu0 0.0
    %1728 = vmatmul.mubr.f32.gmra.mrb[0].mxu0 %v1661
    %v1729 = vpop.f32.mrb[0].mxu0
    %v1730 = vadd.f32 %v1658, %v1729
    %v1731 = vpop.f32.mrb[0].mxu0
    %1732 = vdwg.mxu0
    %vm1733 = vcmask 1024
    %1734 = vst.msk [vmem:[%s11] sm:$0x3] %vm1733, %v1730
    %v1735 = vld [vmem:[%s2] sm:$0x3]
    %v1736 = vsub.f32 %v1730, %v1735
    %v1737 = vmul.f32 %v1736, %v1736
    %v1738 = vsel %vm1733, %v1737, 0.0
    %v1739 = vrot.slane %v1738, 4
    %v1740 = vadd.f32 %v1738, %v1739
    %v1741 = vrot.slane %v1740, 2
    %v1742 = vadd.f32 %v1740, %v1741
    %v1743 = vrot.slane %v1742, 1
    %v1744 = vadd.f32 %v1742, %v1743
    %v1745 = vmul.f32 %v1744, 0.5
    %vm1746 = vcmask 0
    %1747 = vst.msk [vmem:[#allocation3] sm:$0x1] %vm1746, %v1745
    // Predicated region
    $region42: #{main_model_forward.1} parent=1 // pred_check
      _
    $region43: #{main_model_forward.1} parent=1 // pred_check_branch
      %1749 = sbr.rel (0) target = $region45
    $region44: #{main_model_forward.1} parent=1 // pred_region
      %s1751 = ssub.s32 16, 16
      %1752 = vsyncadd [#allocation4], %s1751
      %s1754 = sshll.u32 [#allocation3], 4
      %s1755 = int_to_ptr.vmem [resolvable:$true] %s1754
      %1757 = dma.vmem_to_hbm [thread:$0]  %s1755, 16, %s10, [#allocation4]
    $region45: #{main_model_forward.1} parent=1 // pred_fallthru
      _
    // Predicated region
    $region46: #{main_model_forward.1} parent=1 // pred_check
      _
    $region47: #{main_model_forward.1} parent=1 // pred_check_branch
      %1759 = sbr.rel (0) target = $region49
    $region48: #{main_model_forward.1} parent=1 // pred_region
      _
    $region49: #{main_model_forward.1} parent=1 // pred_fallthru
      _
    // Predicated region
    $region50: #{main_model_forward.1} parent=1 // pred_check
      _
    $region51: #{main_model_forward.1} parent=1 // pred_check_branch
      %1761 = sbr.rel (0) target = $region53
    $region52: #{main_model_forward.1} parent=1 // pred_region
      %1762 = dma.done [#allocation4], 16
    $region53: #{main_model_forward.1} parent=1 // pred_fallthru
      _
    // Predicated region
    $region54: #{main_model_forward.1} parent=1 // pred_check
      _
    $region55: #{main_model_forward.1} parent=1 // pred_check_branch
      %1764 = sbr.rel (0) target = $region57
    $region56: #{main_model_forward.1} parent=1 // pred_region
      _
    $region57: #{main_model_forward.1} parent=1 // pred_fallthru
      _
    %1765 = vsyncpa [#allocation4], 1

</llo_original>
